<compile_context>
chip_gen: v6e
topology: v6e:2x2x1
jax: 0.10.0
libtpu: 0.0.40
codegen_flags: <defaults>
</compile_context>

<pallas_src>
import math

import jax
import jax.numpy as jnp
from jax import lax
from jax.experimental import pallas as pl
from jax.experimental.pallas import tpu as pltpu

EPS = 1e-07
ROW_TILE = 128     # rows per grid step (multiple of 8; VMEM-safe on v7x's 64 MiB)
STATS_W = 128      # lane-dense stats row width


def _round_up(x, m):
    return (x + m - 1) // m * m


# ----------------------------------------------------------------------------
# Fused synthetic-net kernel: both MLP levels in one call, packed lane-dense
# output slab [rgb0(3) | acc0(1) | w0(s0) | rgb1(3) | acc1(1) | w1(s1) | pad].
# ----------------------------------------------------------------------------
def _net_levels_kernel(x_ref,
                       w1a_ref, b1a_ref, wra_ref, bra_ref, wwa_ref, bwa_ref,
                       w1b_ref, b1b_ref, wrb_ref, brb_ref, wwb_ref, bwb_ref,
                       out_ref):
    x = x_ref[...]

    def level(w1_ref, b1_ref, wr_ref, br_ref, ww_ref, bw_ref):
        h = jnp.maximum(
            jnp.dot(x, w1_ref[...], preferred_element_type=jnp.float32) + b1_ref[...],
            0.0)
        zr = jnp.dot(h, wr_ref[...], preferred_element_type=jnp.float32) + br_ref[...]
        rgb = pl.reciprocal(1.0 + jnp.exp(-zr), approx=True)         # sigmoid (EUP)
        raw = jnp.dot(h, ww_ref[...], preferred_element_type=jnp.float32) + bw_ref[...]
        raw = raw - jnp.max(raw, axis=-1, keepdims=True)
        e = jnp.exp(raw)
        wts = e * pl.reciprocal(jnp.sum(e, axis=-1, keepdims=True), approx=True) * 0.9
        acc = jnp.sum(wts, axis=-1, keepdims=True)
        return rgb, acc, wts

    rgb0, acc0, wts0 = level(w1a_ref, b1a_ref, wra_ref, bra_ref, wwa_ref, bwa_ref)
    rgb1, acc1, wts1 = level(w1b_ref, b1b_ref, wrb_ref, brb_ref, wwb_ref, bwb_ref)

    pieces = [rgb0, acc0, wts0, rgb1, acc1, wts1]
    width = sum(p.shape[-1] for p in pieces)
    pad_w = out_ref.shape[-1] - width
    if pad_w:
        pieces.append(jnp.zeros((x.shape[0], pad_w), jnp.float32))
    out_ref[...] = jnp.concatenate(pieces, axis=-1)   # one unmasked wide store


# ----------------------------------------------------------------------------
# Fused loss kernel: per row-tile partial SUMS of
#   [color_mse_0, color_mse_1, msk_mse_0, msk_mse_1, prop_1, dist_0, dist_1]
# written lane-dense into rows of an (n_tiles*8, 128) f32 output.
# ----------------------------------------------------------------------------
def _fused_loss_kernel(rgb0_ref, acc0_ref, w0_ref, t0_ref,
                       rgb1_ref, acc1_ref, w1_ref, t1_ref,
                       gt_ref, msk_ref, out_ref):
    rgb0 = rgb0_ref[...]
    rgb1 = rgb1_ref[...]
    gt = gt_ref[...]
    acc0 = acc0_ref[...]
    acc1 = acc1_ref[...]
    msk = msk_ref[...]
    w0 = w0_ref[...]
    w1 = w1_ref[...]
    t0 = t0_ref[...]
    t1 = t1_ref[...]

    # ---- color / msk MSE (sums; normalization happens in the wrapper) ----
    d0 = rgb0 - gt
    d1 = rgb1 - gt
    c_sum_0 = jnp.sum(d0 * d0)
    c_sum_1 = jnp.sum(d1 * d1)
    a0 = acc0 - msk
    a1 = acc1 - msk
    m_sum_0 = jnp.sum(a0 * a0)
    m_sum_1 = jnp.sum(a1 * a1)

    # ---- proposal loss (lossfun_outer): envelope (t1, w1) vs inner (t0, w0) ----
    # Only one rank-3 tensor (cmp) is materialized.
    s1 = w1.shape[-1]
    tm = t1[:, 1:s1]                                              # interior envelope edges
    cmp = (tm[:, None, :] <= t0[:, :, None]).astype(jnp.float32)  # (T, s0+1, s1-1)
    hi = jnp.sum(w1[:, None, 1:] * cmp[:, 1:, :], axis=-1)        # sum_{j<=idx_hi} w1 - w1[0]
    lo = jnp.sum(w1[:, None, :s1 - 1] * cmp[:, :-1, :], axis=-1)  # sum_{j<idx_lo} w1
    w_outer = w1[:, 0:1] + hi - lo
    diff = jnp.maximum(w0 - w_outer, 0.0)
    p_sum_1 = jnp.sum(diff * diff / (w0 + EPS))

    # ---- distortion (sum over rows of sum_j w_i w_j |t_i - t_j|, t = linspace) ----
    def dist_sum(w):
        s = w.shape[-1]
        ti = lax.broadcasted_iota(jnp.float32, (s, s), 0)
        tj = lax.broadcasted_iota(jnp.float32, (s, s), 1)
        amat = jnp.abs(ti - tj) * (1.0 / (s - 1))
        wo = jnp.dot(w, amat, preferred_element_type=jnp.float32)   # tiny MXU op
        return jnp.sum(w * wo)

    d_sum_0 = dist_sum(w0)
    d_sum_1 = dist_sum(w1)

    # ---- pack the 7 partial sums into a lane-dense (8, 128) block ----
    lane = lax.broadcasted_iota(jnp.int32, out_ref.shape, 1)
    out = jnp.zeros(out_ref.shape, jnp.float32)
    for k, v in enumerate((c_sum_0, c_sum_1, m_sum_0, m_sum_1,
                           p_sum_1, d_sum_0, d_sum_1)):
        out = jnp.where(lane == k, v, out)
    out_ref[...] = out


# ----------------------------------------------------------------------------
# Synthetic net (stands in for the opaque injected `net`)
# ----------------------------------------------------------------------------
class SyntheticNet:
    def __init__(self, key, ray_dim=8, hidden=32, samples=(32, 16)):
        assert len(samples) == 2
        self.samples = samples
        self.ray_dim = ray_dim
        params = []
        for li, s in enumerate(samples):
            k = jax.random.fold_in(key, li)
            k1, k2, k3 = jax.random.split(k, 3)
            params.extend([
                jax.random.normal(k1, (ray_dim, hidden), jnp.float32) * 0.3,
                jnp.zeros((1, hidden), jnp.float32),
                jax.random.normal(k2, (hidden, 3), jnp.float32) * 0.3,
                jnp.zeros((1, 3), jnp.float32),
                jax.random.normal(k3, (hidden, s), jnp.float32) * 0.3,
                jnp.zeros((1, s), jnp.float32),
            ])
        self.params_flat = params
        self._tvals_cache = {}

    def _t_vals(self, b, r):
        # precomputed once per (b, r) shape instead of per forward call
        key = (b, r)
        if key not in self._tvals_cache:
            tv = []
            for li, s in enumerate(self.samples):
                tk = jax.random.fold_in(jax.random.PRNGKey(1), li)
                tv.append(jnp.sort(
                    jax.random.uniform(tk, (b, r, s + 1), jnp.float32), axis=-1))
            self._tvals_cache[key] = tuple(tv)
        return self._tvals_cache[key]

    def __call__(self, batch):
        rays = batch['rays'].astype(jnp.float32)
        b, r, d = rays.shape
        n = b * r
        x = rays.reshape(n, d)
        n_pad = _round_up(n, ROW_TILE)
        if n_pad != n:
            x = jnp.pad(x, ((0, n_pad - n), (0, 0)))
        s0, s1 = self.samples
        width = (4 + s0) + (4 + s1)
        out_w = _round_up(max(width, 128), 128)

        param_specs = [pl.BlockSpec(p.shape, lambda i: (0, 0))
                       for p in self.params_flat]
        packed = pl.pallas_call(
            _net_levels_kernel,
            out_shape=jax.ShapeDtypeStruct((n_pad, out_w), jnp.float32),
            grid=(n_pad // ROW_TILE,),
            in_specs=[pl.BlockSpec((ROW_TILE, d), lambda i: (i, 0))] + param_specs,
            out_specs=pl.BlockSpec((ROW_TILE, out_w), lambda i: (i, 0)),
            compiler_params=pltpu.CompilerParams(
                dimension_semantics=("parallel",)),
        )(x, *self.params_flat)
        packed = packed[:n]

        o1 = 4 + s0
        t0, t1 = self._t_vals(b, r)
        output = {
            'rgb_map_0': packed[:, 0:3].reshape(b, r, 3),
            'acc_map_0': packed[:, 3].reshape(b, r),
            'weights_0': packed[:, 4:4 + s0].reshape(b, r, s0),
            't_vals_0': t0,
            'rgb_map_1': packed[:, o1:o1 + 3].reshape(b, r, 3),
            'acc_map_1': packed[:, o1 + 3].reshape(b, r),
            'weights_1': packed[:, o1 + 4:o1 + 4 + s1].reshape(b, r, s1),
            't_vals_1': t1,
        }
        return output


# ----------------------------------------------------------------------------
# NetworkWrapper (JAX/Pallas port of the torch loss wrapper)
# ----------------------------------------------------------------------------
class NetworkWrapper:
    def __init__(self, net, num_levels=2, msk_weight=0.1,
                 prop_weight=1.0, distortion_weight=0.01):
        self.net = net
        self.level = num_levels
        self.msk_weight = msk_weight
        self.prop_weight = prop_weight
        self.distortion_weight = distortion_weight
        # TODO(synk): perc_loss (VGGPerceptualLoss), plane_tv / time_smooth /
        # l1_time_planes (need opaque encoder internals), rand_bkgd,
        # fg_acc_map and the 6-channel rgb branch are cfg/net-dependent and
        # not translated.

    def _fused_stats(self, output, batch):
        rgb_gt = batch['rgb'].astype(jnp.float32)
        msk = batch['msk'].astype(jnp.float32)
        b, r, _ = rgb_gt.shape
        n = b * r
        s0 = output['weights_0'].shape[-1]
        s1 = output['weights_1'].shape[-1]

        def flat(a):
            return a.reshape(n, -1).astype(jnp.float32)

        arrays = [flat(output['rgb_map_0']), flat(output['acc_map_0']),
                  flat(output['weights_0']), flat(output['t_vals_0']),
                  flat(output['rgb_map_1']), flat(output['acc_map_1']),
                  flat(output['weights_1']), flat(output['t_vals_1']),
                  flat(rgb_gt), flat(msk)]

        n_pad = _round_up(n, ROW_TILE)
        if n_pad != n:
            # zero rows contribute exactly zero to every partial sum
            arrays = [jnp.pad(a, ((0, n_pad - n), (0, 0))) for a in arrays]
        n_tiles = n_pad // ROW_TILE

        in_specs = [pl.BlockSpec((ROW_TILE, a.shape[-1]), lambda i: (i, 0))
                    for a in arrays]
        parts = pl.pallas_call(
            _fused_loss_kernel,
            out_shape=jax.ShapeDtypeStruct((n_tiles * 8, STATS_W), jnp.float32),
            grid=(n_tiles,),
            in_specs=in_specs,
            out_specs=pl.BlockSpec((8, STATS_W), lambda i: (i, 0)),
            compiler_params=pltpu.CompilerParams(
                dimension_semantics=("parallel",)),
        )(*arrays)
        sums = parts.reshape(n_tiles, 8, STATS_W)[:, 0, :].sum(axis=0)
        return {
            'color_mse_0': sums[0] / (n * 3.0),
            'color_mse_1': sums[1] / (n * 3.0),
            'msk_mse_0': sums[2] / float(n),
            'msk_mse_1': sums[3] / float(n),
            'prop_loss_1': sums[4] / (n * float(s0)),
            'distortion_0': sums[5] / (n * float(s0)),
            'distortion_1': sums[6] / (n * float(s1)),
        }

    def forward(self, batch):
        output = self.net(batch)
        # TODO(synk): the fused loss kernel is specialized to the two-level
        # (coarse + proposal) output layout produced by the injected net.
        stats = self._fused_stats(output, batch)
        loss = 0.0
        scalar_stats = {}
        for i in range(self.level):
            suffix = '_{}'.format(i)
            if ('rgb_map' + suffix) in output:
                color_mse = stats['color_mse' + suffix]
                psnr = -10.0 * jnp.log(color_mse) / math.log(10.0)
                scalar_stats['psnr' + suffix] = psnr
                scalar_stats['color_mse' + suffix] = color_mse
                loss = loss + color_mse
            if ('acc_map' + suffix) in output and 'msk' in batch and self.msk_weight > 0.0:
                msk_mse = stats['msk_mse' + suffix]
                scalar_stats['msk_mse' + suffix] = msk_mse
                loss = loss + self.msk_weight * msk_mse
            if i >= 1 and self.prop_weight > 0.0 and ('weights' + suffix) in output:
                p = stats['prop_loss' + suffix]
                scalar_stats['prop_loss' + suffix] = p
                loss = loss + self.prop_weight * jnp.where(jnp.isnan(p), 0.0, p)
            if self.distortion_weight > 0.0 and ('weights' + suffix) in output:
                d = stats['distortion' + suffix]
                scalar_stats['distortion' + suffix] = d
                loss = loss + self.distortion_weight * jnp.where(jnp.isnan(d), 0.0, d)
        scalar_stats['loss'] = loss
        image_stats = {}
        return output, loss, scalar_stats, image_stats

    __call__ = forward


# ----------------------------------------------------------------------------
if __name__ == "__main__":
    key = jax.random.PRNGKey(0)
    B, R, D = 2, 64, 8                    # batch, rays-per-batch, ray feature dim
    kr, krgb, kmsk, knet = jax.random.split(key, 4)
    batch = {
        'rays': jax.random.normal(kr, (B, R, D), jnp.float32),
        'rgb': jax.random.uniform(krgb, (B, R, 3), jnp.float32),
        'msk': (jax.random.uniform(kmsk, (B, R), jnp.float32) > 0.5).astype(jnp.float32),
        'step': 0,
    }
    net = SyntheticNet(knet, ray_dim=D, hidden=32, samples=(32, 16))
    wrapper = NetworkWrapper(net, num_levels=2)

    output, loss, scalar_stats, image_stats = wrapper(batch)
    jax.block_until_ready(loss)
    jax.block_until_ready(scalar_stats['prop_loss_1'])
    jax.block_until_ready(scalar_stats['distortion_0'])
    print("KERNEL_OK")
</pallas_src>

<mosaic_0001>
module attributes {stable_mosaic.version = 11 : i64} {
  func.func @_net_levels_kernel(%arg0: i32, %arg1: memref<128x8xf32, #tpu.memory_space<vmem>>, %arg2: memref<8x32xf32, #tpu.memory_space<vmem>>, %arg3: memref<1x32xf32, #tpu.memory_space<vmem>>, %arg4: memref<32x3xf32, #tpu.memory_space<vmem>>, %arg5: memref<1x3xf32, #tpu.memory_space<vmem>>, %arg6: memref<32x32xf32, #tpu.memory_space<vmem>>, %arg7: memref<1x32xf32, #tpu.memory_space<vmem>>, %arg8: memref<8x32xf32, #tpu.memory_space<vmem>>, %arg9: memref<1x32xf32, #tpu.memory_space<vmem>>, %arg10: memref<32x3xf32, #tpu.memory_space<vmem>>, %arg11: memref<1x3xf32, #tpu.memory_space<vmem>>, %arg12: memref<32x16xf32, #tpu.memory_space<vmem>>, %arg13: memref<1x16xf32, #tpu.memory_space<vmem>>, %arg14: memref<128x128xf32, #tpu.memory_space<vmem>>) attributes {dimension_semantics = [#tpu.dimension_semantics<parallel>], iteration_bounds = array<i64: 1>, scalar_prefetch = 0 : i64, scratch_operands = 0 : i64, tpu.core_type = #tpu.core_type<tc>, window_params = [{transform_indices = @transform_0, window_bounds = array<i64: 128, 8>}, {pipeline_mode = #tpu.pipeline_mode<synchronous>, transform_indices = @transform_1, window_bounds = array<i64: 8, 32>}, {pipeline_mode = #tpu.pipeline_mode<synchronous>, transform_indices = @transform_2, window_bounds = array<i64: 1, 32>}, {pipeline_mode = #tpu.pipeline_mode<synchronous>, transform_indices = @transform_3, window_bounds = array<i64: 32, 3>}, {pipeline_mode = #tpu.pipeline_mode<synchronous>, transform_indices = @transform_4, window_bounds = array<i64: 1, 3>}, {pipeline_mode = #tpu.pipeline_mode<synchronous>, transform_indices = @transform_5, window_bounds = array<i64: 32, 32>}, {pipeline_mode = #tpu.pipeline_mode<synchronous>, transform_indices = @transform_6, window_bounds = array<i64: 1, 32>}, {pipeline_mode = #tpu.pipeline_mode<synchronous>, transform_indices = @transform_7, window_bounds = array<i64: 8, 32>}, {pipeline_mode = #tpu.pipeline_mode<synchronous>, transform_indices = @transform_8, window_bounds = array<i64: 1, 32>}, {pipeline_mode = #tpu.pipeline_mode<synchronous>, transform_indices = @transform_9, window_bounds = array<i64: 32, 3>}, {pipeline_mode = #tpu.pipeline_mode<synchronous>, transform_indices = @transform_10, window_bounds = array<i64: 1, 3>}, {pipeline_mode = #tpu.pipeline_mode<synchronous>, transform_indices = @transform_11, window_bounds = array<i64: 32, 16>}, {pipeline_mode = #tpu.pipeline_mode<synchronous>, transform_indices = @transform_12, window_bounds = array<i64: 1, 16>}, {transform_indices = @transform_13, window_bounds = array<i64: 128, 128>}]} {
    %c0 = arith.constant 0 : index
    %c0_0 = arith.constant 0 : index
    %0 = vector.load %arg1[%c0, %c0_0] : memref<128x8xf32, #tpu.memory_space<vmem>>, vector<128x8xf32>
    %c0_1 = arith.constant 0 : index
    %c0_2 = arith.constant 0 : index
    %1 = vector.load %arg2[%c0_1, %c0_2] : memref<8x32xf32, #tpu.memory_space<vmem>>, vector<8x32xf32>
    %cst = arith.constant dense<0.000000e+00> : vector<128x32xf32>
    %2 = tpu.matmul %0, %1, %cst {dimension_numbers = #tpu.dot_dimension_numbers<[1], [0], [0], [1], [0, 0, 1, 1], [], []>} : vector<128x8xf32>, vector<8x32xf32>, vector<128x32xf32> -> vector<128x32xf32>
    %c0_3 = arith.constant 0 : index
    %c0_4 = arith.constant 0 : index
    %3 = vector.load %arg3[%c0_3, %c0_4] : memref<1x32xf32, #tpu.memory_space<vmem>>, vector<1x32xf32>
    %4 = vector.broadcast %3 : vector<1x32xf32> to vector<128x32xf32>
    %5 = arith.addf %2, %4 : vector<128x32xf32>
    %cst_5 = arith.constant 0.000000e+00 : f32
    %6 = vector.broadcast %cst_5 : f32 to vector<128x32xf32>
    %7 = arith.maximumf %5, %6 : vector<128x32xf32>
    %c0_6 = arith.constant 0 : index
    %c0_7 = arith.constant 0 : index
    %8 = vector.load %arg4[%c0_6, %c0_7] : memref<32x3xf32, #tpu.memory_space<vmem>>, vector<32x3xf32>
    %cst_8 = arith.constant dense<0.000000e+00> : vector<128x3xf32>
    %9 = tpu.matmul %7, %8, %cst_8 {dimension_numbers = #tpu.dot_dimension_numbers<[1], [0], [0], [1], [0, 0, 1, 1], [], []>} : vector<128x32xf32>, vector<32x3xf32>, vector<128x3xf32> -> vector<128x3xf32>
    %c0_9 = arith.constant 0 : index
    %c0_10 = arith.constant 0 : index
    %10 = vector.load %arg5[%c0_9, %c0_10] : memref<1x3xf32, #tpu.memory_space<vmem>>, vector<1x3xf32>
    %11 = vector.broadcast %10 : vector<1x3xf32> to vector<128x3xf32>
    %12 = arith.addf %9, %11 : vector<128x3xf32>
    %cst_11 = arith.constant 0.000000e+00 : f32
    %13 = vector.broadcast %cst_11 : f32 to vector<128x3xf32>
    %14 = arith.subf %13, %12 : vector<128x3xf32>
    %15 = math.exp %14 : vector<128x3xf32>
    %cst_12 = arith.constant 1.000000e+00 : f32
    %16 = vector.broadcast %cst_12 : f32 to vector<128x3xf32>
    %17 = arith.addf %16, %15 : vector<128x3xf32>
    %18 = tpu.reciprocal %17 {approx = true} : vector<128x3xf32> -> vector<128x3xf32>
    %c0_13 = arith.constant 0 : index
    %c0_14 = arith.constant 0 : index
    %19 = vector.load %arg6[%c0_13, %c0_14] : memref<32x32xf32, #tpu.memory_space<vmem>>, vector<32x32xf32>
    %cst_15 = arith.constant dense<0.000000e+00> : vector<128x32xf32>
    %20 = tpu.matmul %7, %19, %cst_15 {dimension_numbers = #tpu.dot_dimension_numbers<[1], [0], [0], [1], [0, 0, 1, 1], [], []>} : vector<128x32xf32>, vector<32x32xf32>, vector<128x32xf32> -> vector<128x32xf32>
    %c0_16 = arith.constant 0 : index
    %c0_17 = arith.constant 0 : index
    %21 = vector.load %arg7[%c0_16, %c0_17] : memref<1x32xf32, #tpu.memory_space<vmem>>, vector<1x32xf32>
    %22 = vector.broadcast %21 : vector<1x32xf32> to vector<128x32xf32>
    %23 = arith.addf %20, %22 : vector<128x32xf32>
    %cst_18 = arith.constant dense<0xFF800000> : vector<128xf32>
    %24 = vector.multi_reduction <maximumf>, %23, %cst_18 [1] : vector<128x32xf32> to vector<128xf32>
    %25 = vector.shape_cast %24 : vector<128xf32> to vector<128x1xf32>
    %26 = vector.broadcast %25 : vector<128x1xf32> to vector<128x32xf32>
    %27 = arith.subf %23, %26 : vector<128x32xf32>
    %28 = math.exp %27 : vector<128x32xf32>
    %cst_19 = arith.constant dense<0.000000e+00> : vector<128xf32>
    %29 = vector.multi_reduction <add>, %28, %cst_19 [1] : vector<128x32xf32> to vector<128xf32>
    %30 = vector.shape_cast %29 : vector<128xf32> to vector<128x1xf32>
    %31 = tpu.reciprocal %30 {approx = true} : vector<128x1xf32> -> vector<128x1xf32>
    %32 = vector.broadcast %31 : vector<128x1xf32> to vector<128x32xf32>
    %33 = arith.mulf %28, %32 : vector<128x32xf32>
    %cst_20 = arith.constant 0.899999976 : f32
    %34 = vector.broadcast %cst_20 : f32 to vector<128x32xf32>
    %35 = arith.mulf %33, %34 : vector<128x32xf32>
    %cst_21 = arith.constant dense<0.000000e+00> : vector<128xf32>
    %36 = vector.multi_reduction <add>, %35, %cst_21 [1] : vector<128x32xf32> to vector<128xf32>
    %37 = vector.shape_cast %36 : vector<128xf32> to vector<128x1xf32>
    %c0_22 = arith.constant 0 : index
    %c0_23 = arith.constant 0 : index
    %38 = vector.load %arg8[%c0_22, %c0_23] : memref<8x32xf32, #tpu.memory_space<vmem>>, vector<8x32xf32>
    %cst_24 = arith.constant dense<0.000000e+00> : vector<128x32xf32>
    %39 = tpu.matmul %0, %38, %cst_24 {dimension_numbers = #tpu.dot_dimension_numbers<[1], [0], [0], [1], [0, 0, 1, 1], [], []>} : vector<128x8xf32>, vector<8x32xf32>, vector<128x32xf32> -> vector<128x32xf32>
    %c0_25 = arith.constant 0 : index
    %c0_26 = arith.constant 0 : index
    %40 = vector.load %arg9[%c0_25, %c0_26] : memref<1x32xf32, #tpu.memory_space<vmem>>, vector<1x32xf32>
    %41 = vector.broadcast %40 : vector<1x32xf32> to vector<128x32xf32>
    %42 = arith.addf %39, %41 : vector<128x32xf32>
    %cst_27 = arith.constant 0.000000e+00 : f32
    %43 = vector.broadcast %cst_27 : f32 to vector<128x32xf32>
    %44 = arith.maximumf %42, %43 : vector<128x32xf32>
    %c0_28 = arith.constant 0 : index
    %c0_29 = arith.constant 0 : index
    %45 = vector.load %arg10[%c0_28, %c0_29] : memref<32x3xf32, #tpu.memory_space<vmem>>, vector<32x3xf32>
    %cst_30 = arith.constant dense<0.000000e+00> : vector<128x3xf32>
    %46 = tpu.matmul %44, %45, %cst_30 {dimension_numbers = #tpu.dot_dimension_numbers<[1], [0], [0], [1], [0, 0, 1, 1], [], []>} : vector<128x32xf32>, vector<32x3xf32>, vector<128x3xf32> -> vector<128x3xf32>
    %c0_31 = arith.constant 0 : index
    %c0_32 = arith.constant 0 : index
    %47 = vector.load %arg11[%c0_31, %c0_32] : memref<1x3xf32, #tpu.memory_space<vmem>>, vector<1x3xf32>
    %48 = vector.broadcast %47 : vector<1x3xf32> to vector<128x3xf32>
    %49 = arith.addf %46, %48 : vector<128x3xf32>
    %cst_33 = arith.constant 0.000000e+00 : f32
    %50 = vector.broadcast %cst_33 : f32 to vector<128x3xf32>
    %51 = arith.subf %50, %49 : vector<128x3xf32>
    %52 = math.exp %51 : vector<128x3xf32>
    %cst_34 = arith.constant 1.000000e+00 : f32
    %53 = vector.broadcast %cst_34 : f32 to vector<128x3xf32>
    %54 = arith.addf %53, %52 : vector<128x3xf32>
    %55 = tpu.reciprocal %54 {approx = true} : vector<128x3xf32> -> vector<128x3xf32>
    %c0_35 = arith.constant 0 : index
    %c0_36 = arith.constant 0 : index
    %56 = vector.load %arg12[%c0_35, %c0_36] : memref<32x16xf32, #tpu.memory_space<vmem>>, vector<32x16xf32>
    %cst_37 = arith.constant dense<0.000000e+00> : vector<128x16xf32>
    %57 = tpu.matmul %44, %56, %cst_37 {dimension_numbers = #tpu.dot_dimension_numbers<[1], [0], [0], [1], [0, 0, 1, 1], [], []>} : vector<128x32xf32>, vector<32x16xf32>, vector<128x16xf32> -> vector<128x16xf32>
    %c0_38 = arith.constant 0 : index
    %c0_39 = arith.constant 0 : index
    %58 = vector.load %arg13[%c0_38, %c0_39] : memref<1x16xf32, #tpu.memory_space<vmem>>, vector<1x16xf32>
    %59 = vector.broadcast %58 : vector<1x16xf32> to vector<128x16xf32>
    %60 = arith.addf %57, %59 : vector<128x16xf32>
    %cst_40 = arith.constant dense<0xFF800000> : vector<128xf32>
    %61 = vector.multi_reduction <maximumf>, %60, %cst_40 [1] : vector<128x16xf32> to vector<128xf32>
    %62 = vector.shape_cast %61 : vector<128xf32> to vector<128x1xf32>
    %63 = vector.broadcast %62 : vector<128x1xf32> to vector<128x16xf32>
    %64 = arith.subf %60, %63 : vector<128x16xf32>
    %65 = math.exp %64 : vector<128x16xf32>
    %cst_41 = arith.constant dense<0.000000e+00> : vector<128xf32>
    %66 = vector.multi_reduction <add>, %65, %cst_41 [1] : vector<128x16xf32> to vector<128xf32>
    %67 = vector.shape_cast %66 : vector<128xf32> to vector<128x1xf32>
    %68 = tpu.reciprocal %67 {approx = true} : vector<128x1xf32> -> vector<128x1xf32>
    %69 = vector.broadcast %68 : vector<128x1xf32> to vector<128x16xf32>
    %70 = arith.mulf %65, %69 : vector<128x16xf32>
    %cst_42 = arith.constant 0.899999976 : f32
    %71 = vector.broadcast %cst_42 : f32 to vector<128x16xf32>
    %72 = arith.mulf %70, %71 : vector<128x16xf32>
    %cst_43 = arith.constant dense<0.000000e+00> : vector<128xf32>
    %73 = vector.multi_reduction <add>, %72, %cst_43 [1] : vector<128x16xf32> to vector<128xf32>
    %74 = vector.shape_cast %73 : vector<128xf32> to vector<128x1xf32>
    %cst_44 = arith.constant 0.000000e+00 : f32
    %75 = vector.broadcast %cst_44 : f32 to vector<128x72xf32>
    %76 = tpu.concatenate %18, %37, %35, %55, %74, %72, %75 in 1 : vector<128x3xf32>, vector<128x1xf32>, vector<128x32xf32>, vector<128x3xf32>, vector<128x1xf32>, vector<128x16xf32>, vector<128x72xf32> -> vector<128x128xf32>
    %c0_45 = arith.constant 0 : index
    %c0_46 = arith.constant 0 : index
    %77 = vector.load %arg14[%c0_45, %c0_46] : memref<128x128xf32, #tpu.memory_space<vmem>>, vector<128x128xf32>
    tpu.vector_store %arg14[%c0_45, %c0_46], %76 {strides = array<i32>} : memref<128x128xf32, #tpu.memory_space<vmem>>, vector<128x128xf32>,
    return
  }
  func.func @transform_0(%arg0: i32) -> (i32, i32) {
    %c0_i32 = arith.constant 0 : i32
    %c0_i32_0 = arith.constant 0 : i32
    return %arg0, %c0_i32 : i32, i32
  }
  func.func @transform_1(%arg0: i32) -> (i32, i32) {
    %c0_i32 = arith.constant 0 : i32
    %c0_i32_0 = arith.constant 0 : i32
    %c0_i32_1 = arith.constant 0 : i32
    return %c0_i32, %c0_i32_0 : i32, i32
  }
  func.func @transform_2(%arg0: i32) -> (i32, i32) {
    %c0_i32 = arith.constant 0 : i32
    %c0_i32_0 = arith.constant 0 : i32
    %c0_i32_1 = arith.constant 0 : i32
    return %c0_i32, %c0_i32_0 : i32, i32
  }
  func.func @transform_3(%arg0: i32) -> (i32, i32) {
    %c0_i32 = arith.constant 0 : i32
    %c0_i32_0 = arith.constant 0 : i32
    %c0_i32_1 = arith.constant 0 : i32
    return %c0_i32, %c0_i32_0 : i32, i32
  }
  func.func @transform_4(%arg0: i32) -> (i32, i32) {
    %c0_i32 = arith.constant 0 : i32
    %c0_i32_0 = arith.constant 0 : i32
    %c0_i32_1 = arith.constant 0 : i32
    return %c0_i32, %c0_i32_0 : i32, i32
  }
  func.func @transform_5(%arg0: i32) -> (i32, i32) {
    %c0_i32 = arith.constant 0 : i32
    %c0_i32_0 = arith.constant 0 : i32
    %c0_i32_1 = arith.constant 0 : i32
    return %c0_i32, %c0_i32_0 : i32, i32
  }
  func.func @transform_6(%arg0: i32) -> (i32, i32) {
    %c0_i32 = arith.constant 0 : i32
    %c0_i32_0 = arith.constant 0 : i32
    %c0_i32_1 = arith.constant 0 : i32
    return %c0_i32, %c0_i32_0 : i32, i32
  }
  func.func @transform_7(%arg0: i32) -> (i32, i32) {
    %c0_i32 = arith.constant 0 : i32
    %c0_i32_0 = arith.constant 0 : i32
    %c0_i32_1 = arith.constant 0 : i32
    return %c0_i32, %c0_i32_0 : i32, i32
  }
  func.func @transform_8(%arg0: i32) -> (i32, i32) {
    %c0_i32 = arith.constant 0 : i32
    %c0_i32_0 = arith.constant 0 : i32
    %c0_i32_1 = arith.constant 0 : i32
    return %c0_i32, %c0_i32_0 : i32, i32
  }
  func.func @transform_9(%arg0: i32) -> (i32, i32) {
    %c0_i32 = arith.constant 0 : i32
    %c0_i32_0 = arith.constant 0 : i32
    %c0_i32_1 = arith.constant 0 : i32
    return %c0_i32, %c0_i32_0 : i32, i32
  }
  func.func @transform_10(%arg0: i32) -> (i32, i32) {
    %c0_i32 = arith.constant 0 : i32
    %c0_i32_0 = arith.constant 0 : i32
    %c0_i32_1 = arith.constant 0 : i32
    return %c0_i32, %c0_i32_0 : i32, i32
  }
  func.func @transform_11(%arg0: i32) -> (i32, i32) {
    %c0_i32 = arith.constant 0 : i32
    %c0_i32_0 = arith.constant 0 : i32
    %c0_i32_1 = arith.constant 0 : i32
    return %c0_i32, %c0_i32_0 : i32, i32
  }
  func.func @transform_12(%arg0: i32) -> (i32, i32) {
    %c0_i32 = arith.constant 0 : i32
    %c0_i32_0 = arith.constant 0 : i32
    %c0_i32_1 = arith.constant 0 : i32
    return %c0_i32, %c0_i32_0 : i32, i32
  }
  func.func @transform_13(%arg0: i32) -> (i32, i32) {
    %c0_i32 = arith.constant 0 : i32
    %c0_i32_0 = arith.constant 0 : i32
    return %arg0, %c0_i32 : i32, i32
  }
}

</mosaic_0001>

<llo_original>
// kernel: tpu_custom_call.1
$region0: #{tpu_custom_call.1}
  #allocation0 [shape = 'u32[]', space=smem, size = 0x4, offset = 0x4, fixed_abs, tag = 'smem constant byte address 0x4 - core index']
  #allocation1 [shape = 'u32[144,128]{1,0:T(1,128)}', space=vmem, size = 0x12000, scoped, tag = 'internal scratch']
  %s0 = inlined_call_operand.vmem [shape: f32[128,8], index: 0, kind: input, shape index: {}]
  %s1 = inlined_call_operand.vmem [shape: f32[8,32], index: 1, kind: input, shape index: {}]
  %s2 = inlined_call_operand.vmem [shape: f32[1,32], index: 2, kind: input, shape index: {}]
  %s3 = inlined_call_operand.vmem [shape: f32[32,3], index: 3, kind: input, shape index: {}]
  %s4 = inlined_call_operand.vmem [shape: f32[1,3], index: 4, kind: input, shape index: {}]
  %s5 = inlined_call_operand.vmem [shape: f32[32,32], index: 5, kind: input, shape index: {}]
  %s6 = inlined_call_operand.vmem [shape: f32[1,32], index: 6, kind: input, shape index: {}]
  %s7 = inlined_call_operand.vmem [shape: f32[8,32], index: 7, kind: input, shape index: {}]
  %s8 = inlined_call_operand.vmem [shape: f32[1,32], index: 8, kind: input, shape index: {}]
  %s9 = inlined_call_operand.vmem [shape: f32[32,3], index: 9, kind: input, shape index: {}]
  %s10 = inlined_call_operand.vmem [shape: f32[1,3], index: 10, kind: input, shape index: {}]
  %s11 = inlined_call_operand.vmem [shape: f32[32,16], index: 11, kind: input, shape index: {}]
  %s12 = inlined_call_operand.vmem [shape: f32[1,16], index: 12, kind: input, shape index: {}]
  %s13 = inlined_call_operand.hbm [shape: f32[128,128], index: 13, kind: output, shape index: {}]
  %s14 = sld [smem:[#allocation0]]
  $region62: #{tpu_custom_call.1} parent=0
    _
  %s16 = ssub.s32 1, %s14
  %s17 = scalar_select 0, %s16, %s14
  $region1: #{tpu_custom_call.1} parent=0
    #allocation2 [shape = 'u8[65536]{0}', space=vmem, size = 0x10000, scoped, tag = 'output window, operand 0, single buffered']
    #allocation3 [shape = 's32[1]{0}', space=sflag, size = 0x4, scoped, tag = 'scoped memory for tpu_custom_call.1']
    %18 = vsyncpa [#allocation3], 0
    // Predicated region
    $region2: #{tpu_custom_call.1} parent=1 // pred_check
      _
    $region3: #{tpu_custom_call.1} parent=1 // pred_check_branch
      %20 = sbr.rel (0) target = $region5
    $region4: #{tpu_custom_call.1} parent=1 // pred_region
      _
    $region5: #{tpu_custom_call.1} parent=1 // pred_fallthru
      _
    // Predicated region
    $region6: #{tpu_custom_call.1} parent=1 // pred_check
      _
    $region7: #{tpu_custom_call.1} parent=1 // pred_check_branch
      %22 = sbr.rel (0) target = $region9
    $region8: #{tpu_custom_call.1} parent=1 // pred_region
      _
    $region9: #{tpu_custom_call.1} parent=1 // pred_fallthru
      _
    // Predicated region
    $region10: #{tpu_custom_call.1} parent=1 // pred_check
      _
    $region11: #{tpu_custom_call.1} parent=1 // pred_check_branch
      %24 = sbr.rel (0) target = $region13
    $region12: #{tpu_custom_call.1} parent=1 // pred_region
      _
    $region13: #{tpu_custom_call.1} parent=1 // pred_fallthru
      _
    // Predicated region
    $region14: #{tpu_custom_call.1} parent=1 // pred_check
      _
    $region15: #{tpu_custom_call.1} parent=1 // pred_check_branch
      %26 = sbr.rel (0) target = $region17
    $region16: #{tpu_custom_call.1} parent=1 // pred_region
      _
    $region17: #{tpu_custom_call.1} parent=1 // pred_fallthru
      _
    // Predicated region
    $region18: #{tpu_custom_call.1} parent=1 // pred_check
      _
    $region19: #{tpu_custom_call.1} parent=1 // pred_check_branch
      %28 = sbr.rel (0) target = $region21
    $region20: #{tpu_custom_call.1} parent=1 // pred_region
      _
    $region21: #{tpu_custom_call.1} parent=1 // pred_fallthru
      _
    // Predicated region
    $region22: #{tpu_custom_call.1} parent=1 // pred_check
      _
    $region23: #{tpu_custom_call.1} parent=1 // pred_check_branch
      %30 = sbr.rel (0) target = $region25
    $region24: #{tpu_custom_call.1} parent=1 // pred_region
      _
    $region25: #{tpu_custom_call.1} parent=1 // pred_fallthru
      _
    // Predicated region
    $region26: #{tpu_custom_call.1} parent=1 // pred_check
      _
    $region27: #{tpu_custom_call.1} parent=1 // pred_check_branch
      %32 = sbr.rel (0) target = $region29
    $region28: #{tpu_custom_call.1} parent=1 // pred_region
      _
    $region29: #{tpu_custom_call.1} parent=1 // pred_fallthru
      _
    // Predicated region
    $region30: #{tpu_custom_call.1} parent=1 // pred_check
      _
    $region31: #{tpu_custom_call.1} parent=1 // pred_check_branch
      %34 = sbr.rel (0) target = $region33
    $region32: #{tpu_custom_call.1} parent=1 // pred_region
      _
    $region33: #{tpu_custom_call.1} parent=1 // pred_fallthru
      _
    // Predicated region
    $region34: #{tpu_custom_call.1} parent=1 // pred_check
      _
    $region35: #{tpu_custom_call.1} parent=1 // pred_check_branch
      %36 = sbr.rel (0) target = $region37
    $region36: #{tpu_custom_call.1} parent=1 // pred_region
      _
    $region37: #{tpu_custom_call.1} parent=1 // pred_fallthru
      _
    // Predicated region
    $region38: #{tpu_custom_call.1} parent=1 // pred_check
      _
    $region39: #{tpu_custom_call.1} parent=1 // pred_check_branch
      %38 = sbr.rel (0) target = $region41
    $region40: #{tpu_custom_call.1} parent=1 // pred_region
      _
    $region41: #{tpu_custom_call.1} parent=1 // pred_fallthru
      _
    // Predicated region
    $region42: #{tpu_custom_call.1} parent=1 // pred_check
      _
    $region43: #{tpu_custom_call.1} parent=1 // pred_check_branch
      %40 = sbr.rel (0) target = $region45
    $region44: #{tpu_custom_call.1} parent=1 // pred_region
      _
    $region45: #{tpu_custom_call.1} parent=1 // pred_fallthru
      _
    // Predicated region
    $region46: #{tpu_custom_call.1} parent=1 // pred_check
      _
    $region47: #{tpu_custom_call.1} parent=1 // pred_check_branch
      %42 = sbr.rel (0) target = $region49
    $region48: #{tpu_custom_call.1} parent=1 // pred_region
      _
    $region49: #{tpu_custom_call.1} parent=1 // pred_fallthru
      _
    // Predicated region
    $region50: #{tpu_custom_call.1} parent=1 // pred_check
      _
    $region51: #{tpu_custom_call.1} parent=1 // pred_check_branch
      %44 = sbr.rel (0) target = $region53
    $region52: #{tpu_custom_call.1} parent=1 // pred_region
      _
    $region53: #{tpu_custom_call.1} parent=1 // pred_fallthru
      _
    %v45 = vld [vmem:[%s0] sm:$0xff]
    %v46 = vld [vmem:[%s0 + $0x8] sm:$0xff]
    %v47 = vld [vmem:[%s0 + $0x10] sm:$0xff]
    %v48 = vld [vmem:[%s0 + $0x18] sm:$0xff]
    %v49 = vld [vmem:[%s0 + $0x20] sm:$0xff]
    %v50 = vld [vmem:[%s0 + $0x28] sm:$0xff]
    %v51 = vld [vmem:[%s0 + $0x30] sm:$0xff]
    %v52 = vld [vmem:[%s0 + $0x38] sm:$0xff]
    %v53 = vld [vmem:[%s0 + $0x40] sm:$0xff]
    %v54 = vld [vmem:[%s0 + $0x48] sm:$0xff]
    %v55 = vld [vmem:[%s0 + $0x50] sm:$0xff]
    %v56 = vld [vmem:[%s0 + $0x58] sm:$0xff]
    %v57 = vld [vmem:[%s0 + $0x60] sm:$0xff]
    %v58 = vld [vmem:[%s0 + $0x68] sm:$0xff]
    %v59 = vld [vmem:[%s0 + $0x70] sm:$0xff]
    %v60 = vld [vmem:[%s0 + $0x78] sm:$0xff]
    %v61 = vld [vmem:[%s1] sm:$0xff]
    %v62 = vld [vmem:[%s2] sm:$0x1]
    %v64 = vlaneseq
    %v65 = vshrl.u32 %v64, 7
    %v66 = vsub.s32 0, %v65
    %v67 = vrot.slane %v62, %v66
    %vm69 = vcmask 64512
    %v71 = vsel %vm69, %v45, 0
    %v74 = vsel %vm69, %v46, 0
    %v77 = vsel %vm69, %v47, 0
    %v80 = vsel %vm69, %v48, 0
    %v83 = vsel %vm69, %v49, 0
    %v86 = vsel %vm69, %v50, 0
    %v89 = vsel %vm69, %v51, 0
    %v92 = vsel %vm69, %v52, 0
    %v95 = vsel %vm69, %v53, 0
    %v98 = vsel %vm69, %v54, 0
    %v101 = vsel %vm69, %v55, 0
    %v104 = vsel %vm69, %v56, 0
    %v107 = vsel %vm69, %v57, 0
    %v110 = vsel %vm69, %v58, 0
    %v113 = vsel %vm69, %v59, 0
    %v116 = vsel %vm69, %v60, 0
    %118 = vmatprep.subr.mxu0 0.0
    %119 = vmatpush1.msra.mxu0 0.0
    %120 = vmatprep.subr.mxu0 0.0
    %121 = vmatpush1.msra.mxu0 0.0
    %122 = vmatprep.subr.mxu0 0.0
    %123 = vmatpush1.msra.mxu0 0.0
    %124 = vmatprep.subr.mxu0 0.0
    %125 = vmatpush1.msra.mxu0 0.0
    %126 = vmatprep.subr.mxu0 0.0
    %127 = vmatpush1.msra.mxu0 0.0
    %128 = vmatprep.subr.mxu0 0.0
    %129 = vmatpush1.msra.mxu0 0.0
    %130 = vmatprep.subr.mxu0 0.0
    %131 = vmatpush1.msra.mxu0 0.0
    %132 = vmatprep.subr.mxu0 0.0
    %133 = vmatpush1.msra.mxu0 0.0
    %134 = vmatprep.subr.mxu0 0.0
    %135 = vmatpush1.msra.mxu0 0.0
    %136 = vmatprep.subr.mxu0 0.0
    %137 = vmatpush1.msra.mxu0 0.0
    %138 = vmatprep.subr.mxu0 0.0
    %139 = vmatpush1.msra.mxu0 0.0
    %140 = vmatprep.subr.mxu0 0.0
    %141 = vmatpush1.msra.mxu0 0.0
    %142 = vmatprep.subr.mxu0 0.0
    %143 = vmatpush1.msra.mxu0 0.0
    %144 = vmatprep.subr.mxu0 0.0
    %145 = vmatpush1.msra.mxu0 0.0
    %146 = vmatprep.subr.mxu0 0.0
    %147 = vmatpush1.msra.mxu0 0.0
    %148 = vmatprep.subr.mxu0 0.0
    %149 = vmatpush1.msra.mxu0 %v61
    %150 = vmatprep.subr.mxu0 0.0
    %151 = vmatpush2.msra.mxu0 0.0
    %152 = vmatprep.subr.mxu0 0.0
    %153 = vmatpush2.msra.mxu0 0.0
    %154 = vmatprep.subr.mxu0 0.0
    %155 = vmatpush2.msra.mxu0 0.0
    %156 = vmatprep.subr.mxu0 0.0
    %157 = vmatpush2.msra.mxu0 0.0
    %158 = vmatprep.subr.mxu0 0.0
    %159 = vmatpush2.msra.mxu0 0.0
    %160 = vmatprep.subr.mxu0 0.0
    %161 = vmatpush2.msra.mxu0 0.0
    %162 = vmatprep.subr.mxu0 0.0
    %163 = vmatpush2.msra.mxu0 0.0
    %164 = vmatprep.subr.mxu0 0.0
    %165 = vmatpush2.msra.mxu0 0.0
    %166 = vmatprep.subr.mxu0 0.0
    %167 = vmatpush2.msra.mxu0 0.0
    %168 = vmatprep.subr.mxu0 0.0
    %169 = vmatpush2.msra.mxu0 0.0
    %170 = vmatprep.subr.mxu0 0.0
    %171 = vmatpush2.msra.mxu0 0.0
    %172 = vmatprep.subr.mxu0 0.0
    %173 = vmatpush2.msra.mxu0 0.0
    %174 = vmatprep.subr.mxu0 0.0
    %175 = vmatpush2.msra.mxu0 0.0
    %176 = vmatprep.subr.mxu0 0.0
    %177 = vmatpush2.msra.mxu0 0.0
    %178 = vmatprep.subr.mxu0 0.0
    %179 = vmatpush2.msra.mxu0 0.0
    %180 = vmatprep.subr.mxu0 0.0
    %181 = vmatpush2.msra.mxu0 0.0
    %182 = vmatprep.mubr.f32.mxu0 0.0
    %183 = vmatmul.mubr.f32.gmra.mxu0 %v71
    %v184 = vpop.f32.mrf.mxu0
    %v185 = vadd.f32 %v67, %v184
    %v186 = vpop.f32.mrf.mxu0
    %187 = vmatprep.mubr.f32.mxu0 0.0
    %188 = vmatmul.mubr.f32.gmra.mxu0 %v74
    %v189 = vpop.f32.mrf.mxu0
    %v190 = vadd.f32 %v67, %v189
    %v191 = vpop.f32.mrf.mxu0
    %192 = vmatprep.mubr.f32.mxu0 0.0
    %193 = vmatmul.mubr.f32.gmra.mxu0 %v77
    %v194 = vpop.f32.mrf.mxu0
    %v195 = vadd.f32 %v67, %v194
    %v196 = vpop.f32.mrf.mxu0
    %197 = vmatprep.mubr.f32.mxu0 0.0
    %198 = vmatmul.mubr.f32.gmra.mxu0 %v80
    %v199 = vpop.f32.mrf.mxu0
    %v200 = vadd.f32 %v67, %v199
    %v201 = vpop.f32.mrf.mxu0
    %202 = vmatprep.mubr.f32.mxu0 0.0
    %203 = vmatmul.mubr.f32.gmra.mxu0 %v83
    %v204 = vpop.f32.mrf.mxu0
    %v205 = vadd.f32 %v67, %v204
    %v206 = vpop.f32.mrf.mxu0
    %207 = vmatprep.mubr.f32.mxu0 0.0
    %208 = vmatmul.mubr.f32.gmra.mxu0 %v86
    %v209 = vpop.f32.mrf.mxu0
    %v210 = vadd.f32 %v67, %v209
    %v211 = vpop.f32.mrf.mxu0
    %212 = vmatprep.mubr.f32.mxu0 0.0
    %213 = vmatmul.mubr.f32.gmra.mxu0 %v89
    %v214 = vpop.f32.mrf.mxu0
    %v215 = vadd.f32 %v67, %v214
    %v216 = vpop.f32.mrf.mxu0
    %217 = vmatprep.mubr.f32.mxu0 0.0
    %218 = vmatmul.mubr.f32.gmra.mxu0 %v92
    %v219 = vpop.f32.mrf.mxu0
    %v220 = vadd.f32 %v67, %v219
    %v221 = vpop.f32.mrf.mxu0
    %222 = vmatprep.mubr.f32.mxu0 0.0
    %223 = vmatmul.mubr.f32.gmra.mxu0 %v95
    %v224 = vpop.f32.mrf.mxu0
    %v225 = vadd.f32 %v67, %v224
    %v226 = vpop.f32.mrf.mxu0
    %227 = vmatprep.mubr.f32.mxu0 0.0
    %228 = vmatmul.mubr.f32.gmra.mxu0 %v98
    %v229 = vpop.f32.mrf.mxu0
    %v230 = vadd.f32 %v67, %v229
    %v231 = vpop.f32.mrf.mxu0
    %232 = vmatprep.mubr.f32.mxu0 0.0
    %233 = vmatmul.mubr.f32.gmra.mxu0 %v101
    %v234 = vpop.f32.mrf.mxu0
    %v235 = vadd.f32 %v67, %v234
    %v236 = vpop.f32.mrf.mxu0
    %237 = vmatprep.mubr.f32.mxu0 0.0
    %238 = vmatmul.mubr.f32.gmra.mxu0 %v104
    %v239 = vpop.f32.mrf.mxu0
    %v240 = vadd.f32 %v67, %v239
    %v241 = vpop.f32.mrf.mxu0
    %242 = vmatprep.mubr.f32.mxu0 0.0
    %243 = vmatmul.mubr.f32.gmra.mxu0 %v107
    %v244 = vpop.f32.mrf.mxu0
    %v245 = vadd.f32 %v67, %v244
    %v246 = vpop.f32.mrf.mxu0
    %247 = vmatprep.mubr.f32.mxu0 0.0
    %248 = vmatmul.mubr.f32.gmra.mxu0 %v110
    %v249 = vpop.f32.mrf.mxu0
    %v250 = vadd.f32 %v67, %v249
    %v251 = vpop.f32.mrf.mxu0
    %252 = vmatprep.mubr.f32.mxu0 0.0
    %253 = vmatmul.mubr.f32.gmra.mxu0 %v113
    %v254 = vpop.f32.mrf.mxu0
    %v255 = vadd.f32 %v67, %v254
    %v256 = vpop.f32.mrf.mxu0
    %257 = vmatprep.mubr.f32.mxu0 0.0
    %258 = vmatmul.mubr.f32.gmra.mxu0 %v116
    %v259 = vpop.f32.mrf.mxu0
    %v260 = vadd.f32 %v67, %v259
    %v261 = vpop.f32.mrf.mxu0
    %262 = vdwg.mxu0
    %v263 = vmax.f32 %v185, 0.0
    %v264 = vmax.f32 %v190, 0.0
    %v265 = vmax.f32 %v195, 0.0
    %v266 = vmax.f32 %v200, 0.0
    %v267 = vmax.f32 %v205, 0.0
    %v268 = vmax.f32 %v210, 0.0
    %v269 = vmax.f32 %v215, 0.0
    %v270 = vmax.f32 %v220, 0.0
    %v271 = vmax.f32 %v225, 0.0
    %v272 = vmax.f32 %v230, 0.0
    %v273 = vmax.f32 %v235, 0.0
    %v274 = vmax.f32 %v240, 0.0
    %v275 = vmax.f32 %v245, 0.0
    %v276 = vmax.f32 %v250, 0.0
    %v277 = vmax.f32 %v255, 0.0
    %v278 = vmax.f32 %v260, 0.0
    %v279 = vld [vmem:[%s3] sm:$0xff]
    %v280 = vld [vmem:[%s3 + $0x8] sm:$0xff]
    %v281 = vld [vmem:[%s3 + $0x10] sm:$0xff]
    %v282 = vld [vmem:[%s3 + $0x18] sm:$0xff]
    %v283 = vld [vmem:[%s4] sm:$0x1]
    %v285 = vlaneseq
    %v286 = vshrl.u32 %v285, 7
    %v287 = vsub.s32 0, %v286
    %v288 = vrot.slane %v283, %v287
    %vm290 = vcmask 261120
    %v292 = vsel %vm290, %v263, 0
    %v295 = vsel %vm290, %v264, 0
    %v298 = vsel %vm290, %v265, 0
    %v301 = vsel %vm290, %v266, 0
    %v304 = vsel %vm290, %v267, 0
    %v307 = vsel %vm290, %v268, 0
    %v310 = vsel %vm290, %v269, 0
    %v313 = vsel %vm290, %v270, 0
    %v316 = vsel %vm290, %v271, 0
    %v319 = vsel %vm290, %v272, 0
    %v322 = vsel %vm290, %v273, 0
    %v325 = vsel %vm290, %v274, 0
    %v328 = vsel %vm290, %v275, 0
    %v331 = vsel %vm290, %v276, 0
    %v334 = vsel %vm290, %v277, 0
    %v337 = vsel %vm290, %v278, 0
    %339 = vmatprep.subr.mxu0 0.0
    %340 = vmatpush1.msra.mxu0 0.0
    %341 = vmatprep.subr.mxu0 0.0
    %342 = vmatpush1.msra.mxu0 0.0
    %343 = vmatprep.subr.mxu0 0.0
    %344 = vmatpush1.msra.mxu0 0.0
    %345 = vmatprep.subr.mxu0 0.0
    %346 = vmatpush1.msra.mxu0 0.0
    %347 = vmatprep.subr.mxu0 0.0
    %348 = vmatpush1.msra.mxu0 0.0
    %349 = vmatprep.subr.mxu0 0.0
    %350 = vmatpush1.msra.mxu0 0.0
    %351 = vmatprep.subr.mxu0 0.0
    %352 = vmatpush1.msra.mxu0 0.0
    %353 = vmatprep.subr.mxu0 0.0
    %354 = vmatpush1.msra.mxu0 0.0
    %355 = vmatprep.subr.mxu0 0.0
    %356 = vmatpush1.msra.mxu0 0.0
    %357 = vmatprep.subr.mxu0 0.0
    %358 = vmatpush1.msra.mxu0 0.0
    %359 = vmatprep.subr.mxu0 0.0
    %360 = vmatpush1.msra.mxu0 0.0
    %361 = vmatprep.subr.mxu0 0.0
    %362 = vmatpush1.msra.mxu0 0.0
    %363 = vmatprep.subr.mxu0 0.0
    %364 = vmatpush1.msra.mxu0 %v282
    %365 = vmatprep.subr.mxu0 0.0
    %366 = vmatpush1.msra.mxu0 %v281
    %367 = vmatprep.subr.mxu0 0.0
    %368 = vmatpush1.msra.mxu0 %v280
    %369 = vmatprep.subr.mxu0 0.0
    %370 = vmatpush1.msra.mxu0 %v279
    %371 = vmatprep.subr.mxu0 0.0
    %372 = vmatpush2.msra.mxu0 0.0
    %373 = vmatprep.subr.mxu0 0.0
    %374 = vmatpush2.msra.mxu0 0.0
    %375 = vmatprep.subr.mxu0 0.0
    %376 = vmatpush2.msra.mxu0 0.0
    %377 = vmatprep.subr.mxu0 0.0
    %378 = vmatpush2.msra.mxu0 0.0
    %379 = vmatprep.subr.mxu0 0.0
    %380 = vmatpush2.msra.mxu0 0.0
    %381 = vmatprep.subr.mxu0 0.0
    %382 = vmatpush2.msra.mxu0 0.0
    %383 = vmatprep.subr.mxu0 0.0
    %384 = vmatpush2.msra.mxu0 0.0
    %385 = vmatprep.subr.mxu0 0.0
    %386 = vmatpush2.msra.mxu0 0.0
    %387 = vmatprep.subr.mxu0 0.0
    %388 = vmatpush2.msra.mxu0 0.0
    %389 = vmatprep.subr.mxu0 0.0
    %390 = vmatpush2.msra.mxu0 0.0
    %391 = vmatprep.subr.mxu0 0.0
    %392 = vmatpush2.msra.mxu0 0.0
    %393 = vmatprep.subr.mxu0 0.0
    %394 = vmatpush2.msra.mxu0 0.0
    %395 = vmatprep.subr.mxu0 0.0
    %396 = vmatpush2.msra.mxu0 0.0
    %397 = vmatprep.subr.mxu0 0.0
    %398 = vmatpush2.msra.mxu0 0.0
    %399 = vmatprep.subr.mxu0 0.0
    %400 = vmatpush2.msra.mxu0 0.0
    %401 = vmatprep.subr.mxu0 0.0
    %402 = vmatpush2.msra.mxu0 0.0
    %403 = vmatprep.mubr.f32.mxu0 0.0
    %404 = vmatmul.mubr.f32.gmra.mxu0 %v292
    %v405 = vpop.f32.mrf.mxu0
    %v406 = vadd.f32 %v288, %v405
    %v407 = vpop.f32.mrf.mxu0
    %408 = vmatprep.mubr.f32.mxu0 0.0
    %409 = vmatmul.mubr.f32.gmra.mxu0 %v295
    %v410 = vpop.f32.mrf.mxu0
    %v411 = vadd.f32 %v288, %v410
    %v412 = vpop.f32.mrf.mxu0
    %413 = vmatprep.mubr.f32.mxu0 0.0
    %414 = vmatmul.mubr.f32.gmra.mxu0 %v298
    %v415 = vpop.f32.mrf.mxu0
    %v416 = vadd.f32 %v288, %v415
    %v417 = vpop.f32.mrf.mxu0
    %418 = vmatprep.mubr.f32.mxu0 0.0
    %419 = vmatmul.mubr.f32.gmra.mxu0 %v301
    %v420 = vpop.f32.mrf.mxu0
    %v421 = vadd.f32 %v288, %v420
    %v422 = vpop.f32.mrf.mxu0
    %423 = vmatprep.mubr.f32.mxu0 0.0
    %424 = vmatmul.mubr.f32.gmra.mxu0 %v304
    %v425 = vpop.f32.mrf.mxu0
    %v426 = vadd.f32 %v288, %v425
    %v427 = vpop.f32.mrf.mxu0
    %428 = vmatprep.mubr.f32.mxu0 0.0
    %429 = vmatmul.mubr.f32.gmra.mxu0 %v307
    %v430 = vpop.f32.mrf.mxu0
    %v431 = vadd.f32 %v288, %v430
    %v432 = vpop.f32.mrf.mxu0
    %433 = vmatprep.mubr.f32.mxu0 0.0
    %434 = vmatmul.mubr.f32.gmra.mxu0 %v310
    %v435 = vpop.f32.mrf.mxu0
    %v436 = vadd.f32 %v288, %v435
    %v437 = vpop.f32.mrf.mxu0
    %438 = vmatprep.mubr.f32.mxu0 0.0
    %439 = vmatmul.mubr.f32.gmra.mxu0 %v313
    %v440 = vpop.f32.mrf.mxu0
    %v441 = vadd.f32 %v288, %v440
    %v442 = vpop.f32.mrf.mxu0
    %443 = vmatprep.mubr.f32.mxu0 0.0
    %444 = vmatmul.mubr.f32.gmra.mxu0 %v316
    %v445 = vpop.f32.mrf.mxu0
    %v446 = vadd.f32 %v288, %v445
    %v447 = vpop.f32.mrf.mxu0
    %448 = vmatprep.mubr.f32.mxu0 0.0
    %449 = vmatmul.mubr.f32.gmra.mxu0 %v319
    %v450 = vpop.f32.mrf.mxu0
    %v451 = vadd.f32 %v288, %v450
    %v452 = vpop.f32.mrf.mxu0
    %453 = vmatprep.mubr.f32.mxu0 0.0
    %454 = vmatmul.mubr.f32.gmra.mxu0 %v322
    %v455 = vpop.f32.mrf.mxu0
    %v456 = vadd.f32 %v288, %v455
    %v457 = vpop.f32.mrf.mxu0
    %458 = vmatprep.mubr.f32.mxu0 0.0
    %459 = vmatmul.mubr.f32.gmra.mxu0 %v325
    %v460 = vpop.f32.mrf.mxu0
    %v461 = vadd.f32 %v288, %v460
    %v462 = vpop.f32.mrf.mxu0
    %463 = vmatprep.mubr.f32.mxu0 0.0
    %464 = vmatmul.mubr.f32.gmra.mxu0 %v328
    %v465 = vpop.f32.mrf.mxu0
    %v466 = vadd.f32 %v288, %v465
    %v467 = vpop.f32.mrf.mxu0
    %468 = vmatprep.mubr.f32.mxu0 0.0
    %469 = vmatmul.mubr.f32.gmra.mxu0 %v331
    %v470 = vpop.f32.mrf.mxu0
    %v471 = vadd.f32 %v288, %v470
    %v472 = vpop.f32.mrf.mxu0
    %473 = vmatprep.mubr.f32.mxu0 0.0
    %474 = vmatmul.mubr.f32.gmra.mxu0 %v334
    %v475 = vpop.f32.mrf.mxu0
    %v476 = vadd.f32 %v288, %v475
    %v477 = vpop.f32.mrf.mxu0
    %478 = vmatprep.mubr.f32.mxu0 0.0
    %479 = vmatmul.mubr.f32.gmra.mxu0 %v337
    %v480 = vpop.f32.mrf.mxu0
    %v481 = vadd.f32 %v288, %v480
    %v482 = vpop.f32.mrf.mxu0
    %483 = vdwg.mxu0
    %v484 = vsub.f32 0.0, %v406
    %v485 = vsub.f32 0.0, %v411
    %v486 = vsub.f32 0.0, %v416
    %v487 = vsub.f32 0.0, %v421
    %v488 = vsub.f32 0.0, %v426
    %v489 = vsub.f32 0.0, %v431
    %v490 = vsub.f32 0.0, %v436
    %v491 = vsub.f32 0.0, %v441
    %v492 = vsub.f32 0.0, %v446
    %v493 = vsub.f32 0.0, %v451
    %v494 = vsub.f32 0.0, %v456
    %v495 = vsub.f32 0.0, %v461
    %v496 = vsub.f32 0.0, %v466
    %v497 = vsub.f32 0.0, %v471
    %v498 = vsub.f32 0.0, %v476
    %v499 = vsub.f32 0.0, %v481
    %v500 = vmul.f32 %v484, 1.442695
    %v501 = vpow.pop %v500
    %v502 = vmul.f32 %v485, 1.442695
    %v503 = vpow.pop %v502
    %v504 = vmul.f32 %v486, 1.442695
    %v505 = vpow.pop %v504
    %v506 = vmul.f32 %v487, 1.442695
    %v507 = vpow.pop %v506
    %v508 = vmul.f32 %v488, 1.442695
    %v509 = vpow.pop %v508
    %v510 = vmul.f32 %v489, 1.442695
    %v511 = vpow.pop %v510
    %v512 = vmul.f32 %v490, 1.442695
    %v513 = vpow.pop %v512
    %v514 = vmul.f32 %v491, 1.442695
    %v515 = vpow.pop %v514
    %v516 = vmul.f32 %v492, 1.442695
    %v517 = vpow.pop %v516
    %v518 = vmul.f32 %v493, 1.442695
    %v519 = vpow.pop %v518
    %v520 = vmul.f32 %v494, 1.442695
    %v521 = vpow.pop %v520
    %v522 = vmul.f32 %v495, 1.442695
    %v523 = vpow.pop %v522
    %v524 = vmul.f32 %v496, 1.442695
    %v525 = vpow.pop %v524
    %v526 = vmul.f32 %v497, 1.442695
    %v527 = vpow.pop %v526
    %v528 = vmul.f32 %v498, 1.442695
    %v529 = vpow.pop %v528
    %v530 = vmul.f32 %v499, 1.442695
    %v531 = vpow.pop %v530
    %v532 = vadd.f32 %v501, 1.0
    %v533 = vadd.f32 %v503, 1.0
    %v534 = vadd.f32 %v505, 1.0
    %v535 = vadd.f32 %v507, 1.0
    %v536 = vadd.f32 %v509, 1.0
    %v537 = vadd.f32 %v511, 1.0
    %v538 = vadd.f32 %v513, 1.0
    %v539 = vadd.f32 %v515, 1.0
    %v540 = vadd.f32 %v517, 1.0
    %v541 = vadd.f32 %v519, 1.0
    %v542 = vadd.f32 %v521, 1.0
    %v543 = vadd.f32 %v523, 1.0
    %v544 = vadd.f32 %v525, 1.0
    %v545 = vadd.f32 %v527, 1.0
    %v546 = vadd.f32 %v529, 1.0
    %v547 = vadd.f32 %v531, 1.0
    %v548 = vrcp.pop %v532
    %v549 = vrcp.pop %v533
    %v550 = vrcp.pop %v534
    %v551 = vrcp.pop %v535
    %v552 = vrcp.pop %v536
    %v553 = vrcp.pop %v537
    %v554 = vrcp.pop %v538
    %v555 = vrcp.pop %v539
    %v556 = vrcp.pop %v540
    %v557 = vrcp.pop %v541
    %v558 = vrcp.pop %v542
    %v559 = vrcp.pop %v543
    %v560 = vrcp.pop %v544
    %v561 = vrcp.pop %v545
    %v562 = vrcp.pop %v546
    %v563 = vrcp.pop %v547
    %v564 = vld [vmem:[%s5] sm:$0xff]
    %v565 = vld [vmem:[%s5 + $0x8] sm:$0xff]
    %v566 = vld [vmem:[%s5 + $0x10] sm:$0xff]
    %v567 = vld [vmem:[%s5 + $0x18] sm:$0xff]
    %v568 = vld [vmem:[%s6] sm:$0x1]
    %v570 = vlaneseq
    %v571 = vshrl.u32 %v570, 7
    %v572 = vsub.s32 0, %v571
    %v573 = vrot.slane %v568, %v572
    %575 = vmatprep.subr.mxu0 0.0
    %576 = vmatpush1.msra.mxu0 0.0
    %577 = vmatprep.subr.mxu0 0.0
    %578 = vmatpush1.msra.mxu0 0.0
    %579 = vmatprep.subr.mxu0 0.0
    %580 = vmatpush1.msra.mxu0 0.0
    %581 = vmatprep.subr.mxu0 0.0
    %582 = vmatpush1.msra.mxu0 0.0
    %583 = vmatprep.subr.mxu0 0.0
    %584 = vmatpush1.msra.mxu0 0.0
    %585 = vmatprep.subr.mxu0 0.0
    %586 = vmatpush1.msra.mxu0 0.0
    %587 = vmatprep.subr.mxu0 0.0
    %588 = vmatpush1.msra.mxu0 0.0
    %589 = vmatprep.subr.mxu0 0.0
    %590 = vmatpush1.msra.mxu0 0.0
    %591 = vmatprep.subr.mxu0 0.0
    %592 = vmatpush1.msra.mxu0 0.0
    %593 = vmatprep.subr.mxu0 0.0
    %594 = vmatpush1.msra.mxu0 0.0
    %595 = vmatprep.subr.mxu0 0.0
    %596 = vmatpush1.msra.mxu0 0.0
    %597 = vmatprep.subr.mxu0 0.0
    %598 = vmatpush1.msra.mxu0 0.0
    %599 = vmatprep.subr.mxu0 0.0
    %600 = vmatpush1.msra.mxu0 %v567
    %601 = vmatprep.subr.mxu0 0.0
    %602 = vmatpush1.msra.mxu0 %v566
    %603 = vmatprep.subr.mxu0 0.0
    %604 = vmatpush1.msra.mxu0 %v565
    %605 = vmatprep.subr.mxu0 0.0
    %606 = vmatpush1.msra.mxu0 %v564
    %607 = vmatprep.subr.mxu0 0.0
    %608 = vmatpush2.msra.mxu0 0.0
    %609 = vmatprep.subr.mxu0 0.0
    %610 = vmatpush2.msra.mxu0 0.0
    %611 = vmatprep.subr.mxu0 0.0
    %612 = vmatpush2.msra.mxu0 0.0
    %613 = vmatprep.subr.mxu0 0.0
    %614 = vmatpush2.msra.mxu0 0.0
    %615 = vmatprep.subr.mxu0 0.0
    %616 = vmatpush2.msra.mxu0 0.0
    %617 = vmatprep.subr.mxu0 0.0
    %618 = vmatpush2.msra.mxu0 0.0
    %619 = vmatprep.subr.mxu0 0.0
    %620 = vmatpush2.msra.mxu0 0.0
    %621 = vmatprep.subr.mxu0 0.0
    %622 = vmatpush2.msra.mxu0 0.0
    %623 = vmatprep.subr.mxu0 0.0
    %624 = vmatpush2.msra.mxu0 0.0
    %625 = vmatprep.subr.mxu0 0.0
    %626 = vmatpush2.msra.mxu0 0.0
    %627 = vmatprep.subr.mxu0 0.0
    %628 = vmatpush2.msra.mxu0 0.0
    %629 = vmatprep.subr.mxu0 0.0
    %630 = vmatpush2.msra.mxu0 0.0
    %631 = vmatprep.subr.mxu0 0.0
    %632 = vmatpush2.msra.mxu0 0.0
    %633 = vmatprep.subr.mxu0 0.0
    %634 = vmatpush2.msra.mxu0 0.0
    %635 = vmatprep.subr.mxu0 0.0
    %636 = vmatpush2.msra.mxu0 0.0
    %637 = vmatprep.subr.mxu0 0.0
    %638 = vmatpush2.msra.mxu0 0.0
    %639 = vmatprep.mubr.f32.mxu0 0.0
    %640 = vmatmul.mubr.f32.gmra.mxu0 %v292
    %v641 = vpop.f32.mrf.mxu0
    %v642 = vadd.f32 %v573, %v641
    %v643 = vpop.f32.mrf.mxu0
    %644 = vmatprep.mubr.f32.mxu0 0.0
    %645 = vmatmul.mubr.f32.gmra.mxu0 %v295
    %v646 = vpop.f32.mrf.mxu0
    %v647 = vadd.f32 %v573, %v646
    %v648 = vpop.f32.mrf.mxu0
    %649 = vmatprep.mubr.f32.mxu0 0.0
    %650 = vmatmul.mubr.f32.gmra.mxu0 %v298
    %v651 = vpop.f32.mrf.mxu0
    %v652 = vadd.f32 %v573, %v651
    %v653 = vpop.f32.mrf.mxu0
    %654 = vmatprep.mubr.f32.mxu0 0.0
    %655 = vmatmul.mubr.f32.gmra.mxu0 %v301
    %v656 = vpop.f32.mrf.mxu0
    %v657 = vadd.f32 %v573, %v656
    %v658 = vpop.f32.mrf.mxu0
    %659 = vmatprep.mubr.f32.mxu0 0.0
    %660 = vmatmul.mubr.f32.gmra.mxu0 %v304
    %v661 = vpop.f32.mrf.mxu0
    %v662 = vadd.f32 %v573, %v661
    %v663 = vpop.f32.mrf.mxu0
    %664 = vmatprep.mubr.f32.mxu0 0.0
    %665 = vmatmul.mubr.f32.gmra.mxu0 %v307
    %v666 = vpop.f32.mrf.mxu0
    %v667 = vadd.f32 %v573, %v666
    %v668 = vpop.f32.mrf.mxu0
    %669 = vmatprep.mubr.f32.mxu0 0.0
    %670 = vmatmul.mubr.f32.gmra.mxu0 %v310
    %v671 = vpop.f32.mrf.mxu0
    %v672 = vadd.f32 %v573, %v671
    %v673 = vpop.f32.mrf.mxu0
    %674 = vmatprep.mubr.f32.mxu0 0.0
    %675 = vmatmul.mubr.f32.gmra.mxu0 %v313
    %v676 = vpop.f32.mrf.mxu0
    %v677 = vadd.f32 %v573, %v676
    %v678 = vpop.f32.mrf.mxu0
    %679 = vmatprep.mubr.f32.mxu0 0.0
    %680 = vmatmul.mubr.f32.gmra.mxu0 %v316
    %v681 = vpop.f32.mrf.mxu0
    %v682 = vadd.f32 %v573, %v681
    %v683 = vpop.f32.mrf.mxu0
    %684 = vmatprep.mubr.f32.mxu0 0.0
    %685 = vmatmul.mubr.f32.gmra.mxu0 %v319
    %v686 = vpop.f32.mrf.mxu0
    %v687 = vadd.f32 %v573, %v686
    %v688 = vpop.f32.mrf.mxu0
    %689 = vmatprep.mubr.f32.mxu0 0.0
    %690 = vmatmul.mubr.f32.gmra.mxu0 %v322
    %v691 = vpop.f32.mrf.mxu0
    %v692 = vadd.f32 %v573, %v691
    %v693 = vpop.f32.mrf.mxu0
    %694 = vmatprep.mubr.f32.mxu0 0.0
    %695 = vmatmul.mubr.f32.gmra.mxu0 %v325
    %v696 = vpop.f32.mrf.mxu0
    %v697 = vadd.f32 %v573, %v696
    %v698 = vpop.f32.mrf.mxu0
    %699 = vmatprep.mubr.f32.mxu0 0.0
    %700 = vmatmul.mubr.f32.gmra.mxu0 %v328
    %v701 = vpop.f32.mrf.mxu0
    %v702 = vadd.f32 %v573, %v701
    %v703 = vpop.f32.mrf.mxu0
    %704 = vmatprep.mubr.f32.mxu0 0.0
    %705 = vmatmul.mubr.f32.gmra.mxu0 %v331
    %v706 = vpop.f32.mrf.mxu0
    %v707 = vadd.f32 %v573, %v706
    %v708 = vpop.f32.mrf.mxu0
    %709 = vmatprep.mubr.f32.mxu0 0.0
    %710 = vmatmul.mubr.f32.gmra.mxu0 %v334
    %v711 = vpop.f32.mrf.mxu0
    %v712 = vadd.f32 %v573, %v711
    %v713 = vpop.f32.mrf.mxu0
    %714 = vmatprep.mubr.f32.mxu0 0.0
    %715 = vmatmul.mubr.f32.gmra.mxu0 %v337
    %v716 = vpop.f32.mrf.mxu0
    %v717 = vadd.f32 %v573, %v716
    %v718 = vpop.f32.mrf.mxu0
    %719 = vdwg.mxu0
    %v720 = vsel %vm290, %v642, -inf
    %721 = vmax.xlane.f32.xlu0 %v720
    %v722 = vpop.xlane.xlu0 %721
    %v723 = vsel %vm290, %v647, -inf
    %724 = vmax.xlane.f32.xlu0 %v723
    %v725 = vpop.xlane.xlu0 %724
    %v726 = vsel %vm290, %v652, -inf
    %727 = vmax.xlane.f32.xlu0 %v726
    %v728 = vpop.xlane.xlu0 %727
    %v729 = vsel %vm290, %v657, -inf
    %730 = vmax.xlane.f32.xlu0 %v729
    %v731 = vpop.xlane.xlu0 %730
    %v732 = vsel %vm290, %v662, -inf
    %733 = vmax.xlane.f32.xlu0 %v732
    %v734 = vpop.xlane.xlu0 %733
    %v735 = vsel %vm290, %v667, -inf
    %736 = vmax.xlane.f32.xlu0 %v735
    %v737 = vpop.xlane.xlu0 %736
    %v738 = vsel %vm290, %v672, -inf
    %739 = vmax.xlane.f32.xlu0 %v738
    %v740 = vpop.xlane.xlu0 %739
    %v741 = vsel %vm290, %v677, -inf
    %742 = vmax.xlane.f32.xlu0 %v741
    %v743 = vpop.xlane.xlu0 %742
    %v744 = vsel %vm290, %v682, -inf
    %745 = vmax.xlane.f32.xlu0 %v744
    %v746 = vpop.xlane.xlu0 %745
    %v747 = vsel %vm290, %v687, -inf
    %748 = vmax.xlane.f32.xlu0 %v747
    %v749 = vpop.xlane.xlu0 %748
    %v750 = vsel %vm290, %v692, -inf
    %751 = vmax.xlane.f32.xlu0 %v750
    %v752 = vpop.xlane.xlu0 %751
    %v753 = vsel %vm290, %v697, -inf
    %754 = vmax.xlane.f32.xlu0 %v753
    %v755 = vpop.xlane.xlu0 %754
    %v756 = vsel %vm290, %v702, -inf
    %757 = vmax.xlane.f32.xlu0 %v756
    %v758 = vpop.xlane.xlu0 %757
    %v759 = vsel %vm290, %v707, -inf
    %760 = vmax.xlane.f32.xlu0 %v759
    %v761 = vpop.xlane.xlu0 %760
    %v762 = vsel %vm290, %v712, -inf
    %763 = vmax.xlane.f32.xlu0 %v762
    %v764 = vpop.xlane.xlu0 %763
    %v765 = vsel %vm290, %v717, -inf
    %766 = vmax.xlane.f32.xlu0 %v765
    %v767 = vpop.xlane.xlu0 %766
    %v768 = vsub.f32 %v642, %v722
    %v769 = vsub.f32 %v647, %v725
    %v770 = vsub.f32 %v652, %v728
    %v771 = vsub.f32 %v657, %v731
    %v772 = vsub.f32 %v662, %v734
    %v773 = vsub.f32 %v667, %v737
    %v774 = vsub.f32 %v672, %v740
    %v775 = vsub.f32 %v677, %v743
    %v776 = vsub.f32 %v682, %v746
    %v777 = vsub.f32 %v687, %v749
    %v778 = vsub.f32 %v692, %v752
    %v779 = vsub.f32 %v697, %v755
    %v780 = vsub.f32 %v702, %v758
    %v781 = vsub.f32 %v707, %v761
    %v782 = vsub.f32 %v712, %v764
    %v783 = vsub.f32 %v717, %v767
    %v784 = vmul.f32 %v768, 1.442695
    %v785 = vpow.pop %v784
    %v786 = vmul.f32 %v769, 1.442695
    %v787 = vpow.pop %v786
    %v788 = vmul.f32 %v770, 1.442695
    %v789 = vpow.pop %v788
    %v790 = vmul.f32 %v771, 1.442695
    %v791 = vpow.pop %v790
    %v792 = vmul.f32 %v772, 1.442695
    %v793 = vpow.pop %v792
    %v794 = vmul.f32 %v773, 1.442695
    %v795 = vpow.pop %v794
    %v796 = vmul.f32 %v774, 1.442695
    %v797 = vpow.pop %v796
    %v798 = vmul.f32 %v775, 1.442695
    %v799 = vpow.pop %v798
    %v800 = vmul.f32 %v776, 1.442695
    %v801 = vpow.pop %v800
    %v802 = vmul.f32 %v777, 1.442695
    %v803 = vpow.pop %v802
    %v804 = vmul.f32 %v778, 1.442695
    %v805 = vpow.pop %v804
    %v806 = vmul.f32 %v779, 1.442695
    %v807 = vpow.pop %v806
    %v808 = vmul.f32 %v780, 1.442695
    %v809 = vpow.pop %v808
    %v810 = vmul.f32 %v781, 1.442695
    %v811 = vpow.pop %v810
    %v812 = vmul.f32 %v782, 1.442695
    %v813 = vpow.pop %v812
    %v814 = vmul.f32 %v783, 1.442695
    %v815 = vpow.pop %v814
    %v816 = vsel %vm290, %v785, 0.0
    %817 = vadd.xlane.f32.xlu0 %v816
    %v818 = vpop.xlane.xlu0 %817
    %v819 = vsel %vm290, %v787, 0.0
    %820 = vadd.xlane.f32.xlu0 %v819
    %v821 = vpop.xlane.xlu0 %820
    %v822 = vsel %vm290, %v789, 0.0
    %823 = vadd.xlane.f32.xlu0 %v822
    %v824 = vpop.xlane.xlu0 %823
    %v825 = vsel %vm290, %v791, 0.0
    %826 = vadd.xlane.f32.xlu0 %v825
    %v827 = vpop.xlane.xlu0 %826
    %v828 = vsel %vm290, %v793, 0.0
    %829 = vadd.xlane.f32.xlu0 %v828
    %v830 = vpop.xlane.xlu0 %829
    %v831 = vsel %vm290, %v795, 0.0
    %832 = vadd.xlane.f32.xlu0 %v831
    %v833 = vpop.xlane.xlu0 %832
    %v834 = vsel %vm290, %v797, 0.0
    %835 = vadd.xlane.f32.xlu0 %v834
    %v836 = vpop.xlane.xlu0 %835
    %v837 = vsel %vm290, %v799, 0.0
    %838 = vadd.xlane.f32.xlu0 %v837
    %v839 = vpop.xlane.xlu0 %838
    %v840 = vsel %vm290, %v801, 0.0
    %841 = vadd.xlane.f32.xlu0 %v840
    %v842 = vpop.xlane.xlu0 %841
    %v843 = vsel %vm290, %v803, 0.0
    %844 = vadd.xlane.f32.xlu0 %v843
    %v845 = vpop.xlane.xlu0 %844
    %v846 = vsel %vm290, %v805, 0.0
    %847 = vadd.xlane.f32.xlu0 %v846
    %v848 = vpop.xlane.xlu0 %847
    %v849 = vsel %vm290, %v807, 0.0
    %850 = vadd.xlane.f32.xlu0 %v849
    %v851 = vpop.xlane.xlu0 %850
    %v852 = vsel %vm290, %v809, 0.0
    %853 = vadd.xlane.f32.xlu0 %v852
    %v854 = vpop.xlane.xlu0 %853
    %v855 = vsel %vm290, %v811, 0.0
    %856 = vadd.xlane.f32.xlu0 %v855
    %v857 = vpop.xlane.xlu0 %856
    %v858 = vsel %vm290, %v813, 0.0
    %859 = vadd.xlane.f32.xlu0 %v858
    %v860 = vpop.xlane.xlu0 %859
    %v861 = vsel %vm290, %v815, 0.0
    %862 = vadd.xlane.f32.xlu0 %v861
    %v863 = vpop.xlane.xlu0 %862
    %v864 = vrcp.pop %v818
    %v865 = vrcp.pop %v821
    %v866 = vrcp.pop %v824
    %v867 = vrcp.pop %v827
    %v868 = vrcp.pop %v830
    %v869 = vrcp.pop %v833
    %v870 = vrcp.pop %v836
    %v871 = vrcp.pop %v839
    %v872 = vrcp.pop %v842
    %v873 = vrcp.pop %v845
    %v874 = vrcp.pop %v848
    %v875 = vrcp.pop %v851
    %v876 = vrcp.pop %v854
    %v877 = vrcp.pop %v857
    %v878 = vrcp.pop %v860
    %v879 = vrcp.pop %v863
    %v880 = vmul.f32 %v785, %v864
    %v881 = vmul.f32 %v787, %v865
    %v882 = vmul.f32 %v789, %v866
    %v883 = vmul.f32 %v791, %v867
    %v884 = vmul.f32 %v793, %v868
    %v885 = vmul.f32 %v795, %v869
    %v886 = vmul.f32 %v797, %v870
    %v887 = vmul.f32 %v799, %v871
    %v888 = vmul.f32 %v801, %v872
    %v889 = vmul.f32 %v803, %v873
    %v890 = vmul.f32 %v805, %v874
    %v891 = vmul.f32 %v807, %v875
    %v892 = vmul.f32 %v809, %v876
    %v893 = vmul.f32 %v811, %v877
    %v894 = vmul.f32 %v813, %v878
    %v895 = vmul.f32 %v815, %v879
    %v896 = vmul.f32 %v880, 0.9
    %v897 = vmul.f32 %v881, 0.9
    %v898 = vmul.f32 %v882, 0.9
    %v899 = vmul.f32 %v883, 0.9
    %v900 = vmul.f32 %v884, 0.9
    %v901 = vmul.f32 %v885, 0.9
    %v902 = vmul.f32 %v886, 0.9
    %v903 = vmul.f32 %v887, 0.9
    %v904 = vmul.f32 %v888, 0.9
    %v905 = vmul.f32 %v889, 0.9
    %v906 = vmul.f32 %v890, 0.9
    %v907 = vmul.f32 %v891, 0.9
    %v908 = vmul.f32 %v892, 0.9
    %v909 = vmul.f32 %v893, 0.9
    %v910 = vmul.f32 %v894, 0.9
    %v911 = vmul.f32 %v895, 0.9
    %v912 = vsel %vm290, %v896, 0.0
    %913 = vadd.xlane.f32.xlu0 %v912
    %v914 = vpop.xlane.xlu0 %913
    %v915 = vsel %vm290, %v897, 0.0
    %916 = vadd.xlane.f32.xlu0 %v915
    %v917 = vpop.xlane.xlu0 %916
    %v918 = vsel %vm290, %v898, 0.0
    %919 = vadd.xlane.f32.xlu0 %v918
    %v920 = vpop.xlane.xlu0 %919
    %v921 = vsel %vm290, %v899, 0.0
    %922 = vadd.xlane.f32.xlu0 %v921
    %v923 = vpop.xlane.xlu0 %922
    %v924 = vsel %vm290, %v900, 0.0
    %925 = vadd.xlane.f32.xlu0 %v924
    %v926 = vpop.xlane.xlu0 %925
    %v927 = vsel %vm290, %v901, 0.0
    %928 = vadd.xlane.f32.xlu0 %v927
    %v929 = vpop.xlane.xlu0 %928
    %v930 = vsel %vm290, %v902, 0.0
    %931 = vadd.xlane.f32.xlu0 %v930
    %v932 = vpop.xlane.xlu0 %931
    %v933 = vsel %vm290, %v903, 0.0
    %934 = vadd.xlane.f32.xlu0 %v933
    %v935 = vpop.xlane.xlu0 %934
    %v936 = vsel %vm290, %v904, 0.0
    %937 = vadd.xlane.f32.xlu0 %v936
    %v938 = vpop.xlane.xlu0 %937
    %v939 = vsel %vm290, %v905, 0.0
    %940 = vadd.xlane.f32.xlu0 %v939
    %v941 = vpop.xlane.xlu0 %940
    %v942 = vsel %vm290, %v906, 0.0
    %943 = vadd.xlane.f32.xlu0 %v942
    %v944 = vpop.xlane.xlu0 %943
    %v945 = vsel %vm290, %v907, 0.0
    %946 = vadd.xlane.f32.xlu0 %v945
    %v947 = vpop.xlane.xlu0 %946
    %v948 = vsel %vm290, %v908, 0.0
    %949 = vadd.xlane.f32.xlu0 %v948
    %v950 = vpop.xlane.xlu0 %949
    %v951 = vsel %vm290, %v909, 0.0
    %952 = vadd.xlane.f32.xlu0 %v951
    %v953 = vpop.xlane.xlu0 %952
    %v954 = vsel %vm290, %v910, 0.0
    %955 = vadd.xlane.f32.xlu0 %v954
    %v956 = vpop.xlane.xlu0 %955
    %v957 = vsel %vm290, %v911, 0.0
    %958 = vadd.xlane.f32.xlu0 %v957
    %v959 = vpop.xlane.xlu0 %958
    %v960 = vld [vmem:[%s7] sm:$0xff]
    %v961 = vld [vmem:[%s8] sm:$0x1]
    %v963 = vlaneseq
    %v964 = vshrl.u32 %v963, 7
    %v965 = vsub.s32 0, %v964
    %v966 = vrot.slane %v961, %v965
    %968 = vmatprep.subr.mxu0 0.0
    %969 = vmatpush1.msra.mxu0 0.0
    %970 = vmatprep.subr.mxu0 0.0
    %971 = vmatpush1.msra.mxu0 0.0
    %972 = vmatprep.subr.mxu0 0.0
    %973 = vmatpush1.msra.mxu0 0.0
    %974 = vmatprep.subr.mxu0 0.0
    %975 = vmatpush1.msra.mxu0 0.0
    %976 = vmatprep.subr.mxu0 0.0
    %977 = vmatpush1.msra.mxu0 0.0
    %978 = vmatprep.subr.mxu0 0.0
    %979 = vmatpush1.msra.mxu0 0.0
    %980 = vmatprep.subr.mxu0 0.0
    %981 = vmatpush1.msra.mxu0 0.0
    %982 = vmatprep.subr.mxu0 0.0
    %983 = vmatpush1.msra.mxu0 0.0
    %984 = vmatprep.subr.mxu0 0.0
    %985 = vmatpush1.msra.mxu0 0.0
    %986 = vmatprep.subr.mxu0 0.0
    %987 = vmatpush1.msra.mxu0 0.0
    %988 = vmatprep.subr.mxu0 0.0
    %989 = vmatpush1.msra.mxu0 0.0
    %990 = vmatprep.subr.mxu0 0.0
    %991 = vmatpush1.msra.mxu0 0.0
    %992 = vmatprep.subr.mxu0 0.0
    %993 = vmatpush1.msra.mxu0 0.0
    %994 = vmatprep.subr.mxu0 0.0
    %995 = vmatpush1.msra.mxu0 0.0
    %996 = vmatprep.subr.mxu0 0.0
    %997 = vmatpush1.msra.mxu0 0.0
    %998 = vmatprep.subr.mxu0 0.0
    %999 = vmatpush1.msra.mxu0 %v960
    %1000 = vmatprep.subr.mxu0 0.0
    %1001 = vmatpush2.msra.mxu0 0.0
    %1002 = vmatprep.subr.mxu0 0.0
    %1003 = vmatpush2.msra.mxu0 0.0
    %1004 = vmatprep.subr.mxu0 0.0
    %1005 = vmatpush2.msra.mxu0 0.0
    %1006 = vmatprep.subr.mxu0 0.0
    %1007 = vmatpush2.msra.mxu0 0.0
    %1008 = vmatprep.subr.mxu0 0.0
    %1009 = vmatpush2.msra.mxu0 0.0
    %1010 = vmatprep.subr.mxu0 0.0
    %1011 = vmatpush2.msra.mxu0 0.0
    %1012 = vmatprep.subr.mxu0 0.0
    %1013 = vmatpush2.msra.mxu0 0.0
    %1014 = vmatprep.subr.mxu0 0.0
    %1015 = vmatpush2.msra.mxu0 0.0
    %1016 = vmatprep.subr.mxu0 0.0
    %1017 = vmatpush2.msra.mxu0 0.0
    %1018 = vmatprep.subr.mxu0 0.0
    %1019 = vmatpush2.msra.mxu0 0.0
    %1020 = vmatprep.subr.mxu0 0.0
    %1021 = vmatpush2.msra.mxu0 0.0
    %1022 = vmatprep.subr.mxu0 0.0
    %1023 = vmatpush2.msra.mxu0 0.0
    %1024 = vmatprep.subr.mxu0 0.0
    %1025 = vmatpush2.msra.mxu0 0.0
    %1026 = vmatprep.subr.mxu0 0.0
    %1027 = vmatpush2.msra.mxu0 0.0
    %1028 = vmatprep.subr.mxu0 0.0
    %1029 = vmatpush2.msra.mxu0 0.0
    %1030 = vmatprep.subr.mxu0 0.0
    %1031 = vmatpush2.msra.mxu0 0.0
    %1032 = vmatprep.mubr.f32.mxu0 0.0
    %1033 = vmatmul.mubr.f32.gmra.mxu0 %v71
    %v1034 = vpop.f32.mrf.mxu0
    %v1035 = vadd.f32 %v966, %v1034
    %v1036 = vpop.f32.mrf.mxu0
    %1037 = vmatprep.mubr.f32.mxu0 0.0
    %1038 = vmatmul.mubr.f32.gmra.mxu0 %v74
    %v1039 = vpop.f32.mrf.mxu0
    %v1040 = vadd.f32 %v966, %v1039
    %v1041 = vpop.f32.mrf.mxu0
    %1042 = vmatprep.mubr.f32.mxu0 0.0
    %1043 = vmatmul.mubr.f32.gmra.mxu0 %v77
    %v1044 = vpop.f32.mrf.mxu0
    %v1045 = vadd.f32 %v966, %v1044
    %v1046 = vpop.f32.mrf.mxu0
    %1047 = vmatprep.mubr.f32.mxu0 0.0
    %1048 = vmatmul.mubr.f32.gmra.mxu0 %v80
    %v1049 = vpop.f32.mrf.mxu0
    %v1050 = vadd.f32 %v966, %v1049
    %v1051 = vpop.f32.mrf.mxu0
    %1052 = vmatprep.mubr.f32.mxu0 0.0
    %1053 = vmatmul.mubr.f32.gmra.mxu0 %v83
    %v1054 = vpop.f32.mrf.mxu0
    %v1055 = vadd.f32 %v966, %v1054
    %v1056 = vpop.f32.mrf.mxu0
    %1057 = vmatprep.mubr.f32.mxu0 0.0
    %1058 = vmatmul.mubr.f32.gmra.mxu0 %v86
    %v1059 = vpop.f32.mrf.mxu0
    %v1060 = vadd.f32 %v966, %v1059
    %v1061 = vpop.f32.mrf.mxu0
    %1062 = vmatprep.mubr.f32.mxu0 0.0
    %1063 = vmatmul.mubr.f32.gmra.mxu0 %v89
    %v1064 = vpop.f32.mrf.mxu0
    %v1065 = vadd.f32 %v966, %v1064
    %v1066 = vpop.f32.mrf.mxu0
    %1067 = vmatprep.mubr.f32.mxu0 0.0
    %1068 = vmatmul.mubr.f32.gmra.mxu0 %v92
    %v1069 = vpop.f32.mrf.mxu0
    %v1070 = vadd.f32 %v966, %v1069
    %v1071 = vpop.f32.mrf.mxu0
    %1072 = vmatprep.mubr.f32.mxu0 0.0
    %1073 = vmatmul.mubr.f32.gmra.mxu0 %v95
    %v1074 = vpop.f32.mrf.mxu0
    %v1075 = vadd.f32 %v966, %v1074
    %v1076 = vpop.f32.mrf.mxu0
    %1077 = vmatprep.mubr.f32.mxu0 0.0
    %1078 = vmatmul.mubr.f32.gmra.mxu0 %v98
    %v1079 = vpop.f32.mrf.mxu0
    %v1080 = vadd.f32 %v966, %v1079
    %v1081 = vpop.f32.mrf.mxu0
    %1082 = vmatprep.mubr.f32.mxu0 0.0
    %1083 = vmatmul.mubr.f32.gmra.mxu0 %v101
    %v1084 = vpop.f32.mrf.mxu0
    %v1085 = vadd.f32 %v966, %v1084
    %v1086 = vpop.f32.mrf.mxu0
    %1087 = vmatprep.mubr.f32.mxu0 0.0
    %1088 = vmatmul.mubr.f32.gmra.mxu0 %v104
    %v1089 = vpop.f32.mrf.mxu0
    %v1090 = vadd.f32 %v966, %v1089
    %v1091 = vpop.f32.mrf.mxu0
    %1092 = vmatprep.mubr.f32.mxu0 0.0
    %1093 = vmatmul.mubr.f32.gmra.mxu0 %v107
    %v1094 = vpop.f32.mrf.mxu0
    %v1095 = vadd.f32 %v966, %v1094
    %v1096 = vpop.f32.mrf.mxu0
    %1097 = vmatprep.mubr.f32.mxu0 0.0
    %1098 = vmatmul.mubr.f32.gmra.mxu0 %v110
    %v1099 = vpop.f32.mrf.mxu0
    %v1100 = vadd.f32 %v966, %v1099
    %v1101 = vpop.f32.mrf.mxu0
    %1102 = vmatprep.mubr.f32.mxu0 0.0
    %1103 = vmatmul.mubr.f32.gmra.mxu0 %v113
    %v1104 = vpop.f32.mrf.mxu0
    %v1105 = vadd.f32 %v966, %v1104
    %v1106 = vpop.f32.mrf.mxu0
    %1107 = vmatprep.mubr.f32.mxu0 0.0
    %1108 = vmatmul.mubr.f32.gmra.mxu0 %v116
    %v1109 = vpop.f32.mrf.mxu0
    %v1110 = vadd.f32 %v966, %v1109
    %v1111 = vpop.f32.mrf.mxu0
    %1112 = vdwg.mxu0
    %v1113 = vmax.f32 %v1035, 0.0
    %v1114 = vmax.f32 %v1040, 0.0
    %v1115 = vmax.f32 %v1045, 0.0
    %v1116 = vmax.f32 %v1050, 0.0
    %v1117 = vmax.f32 %v1055, 0.0
    %v1118 = vmax.f32 %v1060, 0.0
    %v1119 = vmax.f32 %v1065, 0.0
    %v1120 = vmax.f32 %v1070, 0.0
    %v1121 = vmax.f32 %v1075, 0.0
    %v1122 = vmax.f32 %v1080, 0.0
    %v1123 = vmax.f32 %v1085, 0.0
    %v1124 = vmax.f32 %v1090, 0.0
    %v1125 = vmax.f32 %v1095, 0.0
    %v1126 = vmax.f32 %v1100, 0.0
    %v1127 = vmax.f32 %v1105, 0.0
    %v1128 = vmax.f32 %v1110, 0.0
    %v1129 = vld [vmem:[%s9] sm:$0xff]
    %v1130 = vld [vmem:[%s9 + $0x8] sm:$0xff]
    %v1131 = vld [vmem:[%s9 + $0x10] sm:$0xff]
    %v1132 = vld [vmem:[%s9 + $0x18] sm:$0xff]
    %v1133 = vld [vmem:[%s10] sm:$0x1]
    %v1135 = vlaneseq
    %v1136 = vshrl.u32 %v1135, 7
    %v1137 = vsub.s32 0, %v1136
    %v1138 = vrot.slane %v1133, %v1137
    %v1141 = vsel %vm290, %v1113, 0
    %v1144 = vsel %vm290, %v1114, 0
    %v1147 = vsel %vm290, %v1115, 0
    %v1150 = vsel %vm290, %v1116, 0
    %v1153 = vsel %vm290, %v1117, 0
    %v1156 = vsel %vm290, %v1118, 0
    %v1159 = vsel %vm290, %v1119, 0
    %v1162 = vsel %vm290, %v1120, 0
    %v1165 = vsel %vm290, %v1121, 0
    %v1168 = vsel %vm290, %v1122, 0
    %v1171 = vsel %vm290, %v1123, 0
    %v1174 = vsel %vm290, %v1124, 0
    %v1177 = vsel %vm290, %v1125, 0
    %v1180 = vsel %vm290, %v1126, 0
    %v1183 = vsel %vm290, %v1127, 0
    %v1186 = vsel %vm290, %v1128, 0
    %1188 = vmatprep.subr.mxu0 0.0
    %1189 = vmatpush1.msra.mxu0 0.0
    %1190 = vmatprep.subr.mxu0 0.0
    %1191 = vmatpush1.msra.mxu0 0.0
    %1192 = vmatprep.subr.mxu0 0.0
    %1193 = vmatpush1.msra.mxu0 0.0
    %1194 = vmatprep.subr.mxu0 0.0
    %1195 = vmatpush1.msra.mxu0 0.0
    %1196 = vmatprep.subr.mxu0 0.0
    %1197 = vmatpush1.msra.mxu0 0.0
    %1198 = vmatprep.subr.mxu0 0.0
    %1199 = vmatpush1.msra.mxu0 0.0
    %1200 = vmatprep.subr.mxu0 0.0
    %1201 = vmatpush1.msra.mxu0 0.0
    %1202 = vmatprep.subr.mxu0 0.0
    %1203 = vmatpush1.msra.mxu0 0.0
    %1204 = vmatprep.subr.mxu0 0.0
    %1205 = vmatpush1.msra.mxu0 0.0
    %1206 = vmatprep.subr.mxu0 0.0
    %1207 = vmatpush1.msra.mxu0 0.0
    %1208 = vmatprep.subr.mxu0 0.0
    %1209 = vmatpush1.msra.mxu0 0.0
    %1210 = vmatprep.subr.mxu0 0.0
    %1211 = vmatpush1.msra.mxu0 0.0
    %1212 = vmatprep.subr.mxu0 0.0
    %1213 = vmatpush1.msra.mxu0 %v1132
    %1214 = vmatprep.subr.mxu0 0.0
    %1215 = vmatpush1.msra.mxu0 %v1131
    %1216 = vmatprep.subr.mxu0 0.0
    %1217 = vmatpush1.msra.mxu0 %v1130
    %1218 = vmatprep.subr.mxu0 0.0
    %1219 = vmatpush1.msra.mxu0 %v1129
    %1220 = vmatprep.subr.mxu0 0.0
    %1221 = vmatpush2.msra.mxu0 0.0
    %1222 = vmatprep.subr.mxu0 0.0
    %1223 = vmatpush2.msra.mxu0 0.0
    %1224 = vmatprep.subr.mxu0 0.0
    %1225 = vmatpush2.msra.mxu0 0.0
    %1226 = vmatprep.subr.mxu0 0.0
    %1227 = vmatpush2.msra.mxu0 0.0
    %1228 = vmatprep.subr.mxu0 0.0
    %1229 = vmatpush2.msra.mxu0 0.0
    %1230 = vmatprep.subr.mxu0 0.0
    %1231 = vmatpush2.msra.mxu0 0.0
    %1232 = vmatprep.subr.mxu0 0.0
    %1233 = vmatpush2.msra.mxu0 0.0
    %1234 = vmatprep.subr.mxu0 0.0
    %1235 = vmatpush2.msra.mxu0 0.0
    %1236 = vmatprep.subr.mxu0 0.0
    %1237 = vmatpush2.msra.mxu0 0.0
    %1238 = vmatprep.subr.mxu0 0.0
    %1239 = vmatpush2.msra.mxu0 0.0
    %1240 = vmatprep.subr.mxu0 0.0
    %1241 = vmatpush2.msra.mxu0 0.0
    %1242 = vmatprep.subr.mxu0 0.0
    %1243 = vmatpush2.msra.mxu0 0.0
    %1244 = vmatprep.subr.mxu0 0.0
    %1245 = vmatpush2.msra.mxu0 0.0
    %1246 = vmatprep.subr.mxu0 0.0
    %1247 = vmatpush2.msra.mxu0 0.0
    %1248 = vmatprep.subr.mxu0 0.0
    %1249 = vmatpush2.msra.mxu0 0.0
    %1250 = vmatprep.subr.mxu0 0.0
    %1251 = vmatpush2.msra.mxu0 0.0
    %1252 = vmatprep.mubr.f32.mxu0 0.0
    %1253 = vmatmul.mubr.f32.gmra.mxu0 %v1141
    %v1254 = vpop.f32.mrf.mxu0
    %v1255 = vadd.f32 %v1138, %v1254
    %v1256 = vpop.f32.mrf.mxu0
    %1257 = vmatprep.mubr.f32.mxu0 0.0
    %1258 = vmatmul.mubr.f32.gmra.mxu0 %v1144
    %v1259 = vpop.f32.mrf.mxu0
    %v1260 = vadd.f32 %v1138, %v1259
    %v1261 = vpop.f32.mrf.mxu0
    %1262 = vmatprep.mubr.f32.mxu0 0.0
    %1263 = vmatmul.mubr.f32.gmra.mxu0 %v1147
    %v1264 = vpop.f32.mrf.mxu0
    %v1265 = vadd.f32 %v1138, %v1264
    %v1266 = vpop.f32.mrf.mxu0
    %1267 = vmatprep.mubr.f32.mxu0 0.0
    %1268 = vmatmul.mubr.f32.gmra.mxu0 %v1150
    %v1269 = vpop.f32.mrf.mxu0
    %v1270 = vadd.f32 %v1138, %v1269
    %v1271 = vpop.f32.mrf.mxu0
    %1272 = vmatprep.mubr.f32.mxu0 0.0
    %1273 = vmatmul.mubr.f32.gmra.mxu0 %v1153
    %v1274 = vpop.f32.mrf.mxu0
    %v1275 = vadd.f32 %v1138, %v1274
    %v1276 = vpop.f32.mrf.mxu0
    %1277 = vmatprep.mubr.f32.mxu0 0.0
    %1278 = vmatmul.mubr.f32.gmra.mxu0 %v1156
    %v1279 = vpop.f32.mrf.mxu0
    %v1280 = vadd.f32 %v1138, %v1279
    %v1281 = vpop.f32.mrf.mxu0
    %1282 = vmatprep.mubr.f32.mxu0 0.0
    %1283 = vmatmul.mubr.f32.gmra.mxu0 %v1159
    %v1284 = vpop.f32.mrf.mxu0
    %v1285 = vadd.f32 %v1138, %v1284
    %v1286 = vpop.f32.mrf.mxu0
    %1287 = vmatprep.mubr.f32.mxu0 0.0
    %1288 = vmatmul.mubr.f32.gmra.mxu0 %v1162
    %v1289 = vpop.f32.mrf.mxu0
    %v1290 = vadd.f32 %v1138, %v1289
    %v1291 = vpop.f32.mrf.mxu0
    %1292 = vmatprep.mubr.f32.mxu0 0.0
    %1293 = vmatmul.mubr.f32.gmra.mxu0 %v1165
    %v1294 = vpop.f32.mrf.mxu0
    %v1295 = vadd.f32 %v1138, %v1294
    %v1296 = vpop.f32.mrf.mxu0
    %1297 = vmatprep.mubr.f32.mxu0 0.0
    %1298 = vmatmul.mubr.f32.gmra.mxu0 %v1168
    %v1299 = vpop.f32.mrf.mxu0
    %v1300 = vadd.f32 %v1138, %v1299
    %v1301 = vpop.f32.mrf.mxu0
    %1302 = vmatprep.mubr.f32.mxu0 0.0
    %1303 = vmatmul.mubr.f32.gmra.mxu0 %v1171
    %v1304 = vpop.f32.mrf.mxu0
    %v1305 = vadd.f32 %v1138, %v1304
    %v1306 = vpop.f32.mrf.mxu0
    %1307 = vmatprep.mubr.f32.mxu0 0.0
    %1308 = vmatmul.mubr.f32.gmra.mxu0 %v1174
    %v1309 = vpop.f32.mrf.mxu0
    %v1310 = vadd.f32 %v1138, %v1309
    %v1311 = vpop.f32.mrf.mxu0
    %1312 = vmatprep.mubr.f32.mxu0 0.0
    %1313 = vmatmul.mubr.f32.gmra.mxu0 %v1177
    %v1314 = vpop.f32.mrf.mxu0
    %v1315 = vadd.f32 %v1138, %v1314
    %v1316 = vpop.f32.mrf.mxu0
    %1317 = vmatprep.mubr.f32.mxu0 0.0
    %1318 = vmatmul.mubr.f32.gmra.mxu0 %v1180
    %v1319 = vpop.f32.mrf.mxu0
    %v1320 = vadd.f32 %v1138, %v1319
    %v1321 = vpop.f32.mrf.mxu0
    %1322 = vmatprep.mubr.f32.mxu0 0.0
    %1323 = vmatmul.mubr.f32.gmra.mxu0 %v1183
    %v1324 = vpop.f32.mrf.mxu0
    %v1325 = vadd.f32 %v1138, %v1324
    %v1326 = vpop.f32.mrf.mxu0
    %1327 = vmatprep.mubr.f32.mxu0 0.0
    %1328 = vmatmul.mubr.f32.gmra.mxu0 %v1186
    %v1329 = vpop.f32.mrf.mxu0
    %v1330 = vadd.f32 %v1138, %v1329
    %v1331 = vpop.f32.mrf.mxu0
    %1332 = vdwg.mxu0
    %v1333 = vsub.f32 0.0, %v1255
    %v1334 = vsub.f32 0.0, %v1260
    %v1335 = vsub.f32 0.0, %v1265
    %v1336 = vsub.f32 0.0, %v1270
    %v1337 = vsub.f32 0.0, %v1275
    %v1338 = vsub.f32 0.0, %v1280
    %v1339 = vsub.f32 0.0, %v1285
    %v1340 = vsub.f32 0.0, %v1290
    %v1341 = vsub.f32 0.0, %v1295
    %v1342 = vsub.f32 0.0, %v1300
    %v1343 = vsub.f32 0.0, %v1305
    %v1344 = vsub.f32 0.0, %v1310
    %v1345 = vsub.f32 0.0, %v1315
    %v1346 = vsub.f32 0.0, %v1320
    %v1347 = vsub.f32 0.0, %v1325
    %v1348 = vsub.f32 0.0, %v1330
    %v1349 = vmul.f32 %v1333, 1.442695
    %v1350 = vpow.pop %v1349
    %v1351 = vmul.f32 %v1334, 1.442695
    %v1352 = vpow.pop %v1351
    %v1353 = vmul.f32 %v1335, 1.442695
    %v1354 = vpow.pop %v1353
    %v1355 = vmul.f32 %v1336, 1.442695
    %v1356 = vpow.pop %v1355
    %v1357 = vmul.f32 %v1337, 1.442695
    %v1358 = vpow.pop %v1357
    %v1359 = vmul.f32 %v1338, 1.442695
    %v1360 = vpow.pop %v1359
    %v1361 = vmul.f32 %v1339, 1.442695
    %v1362 = vpow.pop %v1361
    %v1363 = vmul.f32 %v1340, 1.442695
    %v1364 = vpow.pop %v1363
    %v1365 = vmul.f32 %v1341, 1.442695
    %v1366 = vpow.pop %v1365
    %v1367 = vmul.f32 %v1342, 1.442695
    %v1368 = vpow.pop %v1367
    %v1369 = vmul.f32 %v1343, 1.442695
    %v1370 = vpow.pop %v1369
    %v1371 = vmul.f32 %v1344, 1.442695
    %v1372 = vpow.pop %v1371
    %v1373 = vmul.f32 %v1345, 1.442695
    %v1374 = vpow.pop %v1373
    %v1375 = vmul.f32 %v1346, 1.442695
    %v1376 = vpow.pop %v1375
    %v1377 = vmul.f32 %v1347, 1.442695
    %v1378 = vpow.pop %v1377
    %v1379 = vmul.f32 %v1348, 1.442695
    %v1380 = vpow.pop %v1379
    %v1381 = vadd.f32 %v1350, 1.0
    %v1382 = vadd.f32 %v1352, 1.0
    %v1383 = vadd.f32 %v1354, 1.0
    %v1384 = vadd.f32 %v1356, 1.0
    %v1385 = vadd.f32 %v1358, 1.0
    %v1386 = vadd.f32 %v1360, 1.0
    %v1387 = vadd.f32 %v1362, 1.0
    %v1388 = vadd.f32 %v1364, 1.0
    %v1389 = vadd.f32 %v1366, 1.0
    %v1390 = vadd.f32 %v1368, 1.0
    %v1391 = vadd.f32 %v1370, 1.0
    %v1392 = vadd.f32 %v1372, 1.0
    %v1393 = vadd.f32 %v1374, 1.0
    %v1394 = vadd.f32 %v1376, 1.0
    %v1395 = vadd.f32 %v1378, 1.0
    %v1396 = vadd.f32 %v1380, 1.0
    %v1397 = vrcp.pop %v1381
    %v1398 = vrcp.pop %v1382
    %v1399 = vrcp.pop %v1383
    %v1400 = vrcp.pop %v1384
    %v1401 = vrcp.pop %v1385
    %v1402 = vrcp.pop %v1386
    %v1403 = vrcp.pop %v1387
    %v1404 = vrcp.pop %v1388
    %v1405 = vrcp.pop %v1389
    %v1406 = vrcp.pop %v1390
    %v1407 = vrcp.pop %v1391
    %v1408 = vrcp.pop %v1392
    %v1409 = vrcp.pop %v1393
    %v1410 = vrcp.pop %v1394
    %v1411 = vrcp.pop %v1395
    %v1412 = vrcp.pop %v1396
    %v1413 = vld [vmem:[%s11] sm:$0xff]
    %v1414 = vld [vmem:[%s11 + $0x8] sm:$0xff]
    %v1415 = vld [vmem:[%s11 + $0x10] sm:$0xff]
    %v1416 = vld [vmem:[%s11 + $0x18] sm:$0xff]
    %v1417 = vld [vmem:[%s12] sm:$0x1]
    %v1419 = vlaneseq
    %v1420 = vshrl.u32 %v1419, 7
    %v1421 = vsub.s32 0, %v1420
    %v1422 = vrot.slane %v1417, %v1421
    %1424 = vmatprep.subr.mxu0 0.0
    %1425 = vmatpush1.msra.mxu0 0.0
    %1426 = vmatprep.subr.mxu0 0.0
    %1427 = vmatpush1.msra.mxu0 0.0
    %1428 = vmatprep.subr.mxu0 0.0
    %1429 = vmatpush1.msra.mxu0 0.0
    %1430 = vmatprep.subr.mxu0 0.0
    %1431 = vmatpush1.msra.mxu0 0.0
    %1432 = vmatprep.subr.mxu0 0.0
    %1433 = vmatpush1.msra.mxu0 0.0
    %1434 = vmatprep.subr.mxu0 0.0
    %1435 = vmatpush1.msra.mxu0 0.0
    %1436 = vmatprep.subr.mxu0 0.0
    %1437 = vmatpush1.msra.mxu0 0.0
    %1438 = vmatprep.subr.mxu0 0.0
    %1439 = vmatpush1.msra.mxu0 0.0
    %1440 = vmatprep.subr.mxu0 0.0
    %1441 = vmatpush1.msra.mxu0 0.0
    %1442 = vmatprep.subr.mxu0 0.0
    %1443 = vmatpush1.msra.mxu0 0.0
    %1444 = vmatprep.subr.mxu0 0.0
    %1445 = vmatpush1.msra.mxu0 0.0
    %1446 = vmatprep.subr.mxu0 0.0
    %1447 = vmatpush1.msra.mxu0 0.0
    %1448 = vmatprep.subr.mxu0 0.0
    %1449 = vmatpush1.msra.mxu0 %v1416
    %1450 = vmatprep.subr.mxu0 0.0
    %1451 = vmatpush1.msra.mxu0 %v1415
    %1452 = vmatprep.subr.mxu0 0.0
    %1453 = vmatpush1.msra.mxu0 %v1414
    %1454 = vmatprep.subr.mxu0 0.0
    %1455 = vmatpush1.msra.mxu0 %v1413
    %1456 = vmatprep.subr.mxu0 0.0
    %1457 = vmatpush2.msra.mxu0 0.0
    %1458 = vmatprep.subr.mxu0 0.0
    %1459 = vmatpush2.msra.mxu0 0.0
    %1460 = vmatprep.subr.mxu0 0.0
    %1461 = vmatpush2.msra.mxu0 0.0
    %1462 = vmatprep.subr.mxu0 0.0
    %1463 = vmatpush2.msra.mxu0 0.0
    %1464 = vmatprep.subr.mxu0 0.0
    %1465 = vmatpush2.msra.mxu0 0.0
    %1466 = vmatprep.subr.mxu0 0.0
    %1467 = vmatpush2.msra.mxu0 0.0
    %1468 = vmatprep.subr.mxu0 0.0
    %1469 = vmatpush2.msra.mxu0 0.0
    %1470 = vmatprep.subr.mxu0 0.0
    %1471 = vmatpush2.msra.mxu0 0.0
    %1472 = vmatprep.subr.mxu0 0.0
    %1473 = vmatpush2.msra.mxu0 0.0
    %1474 = vmatprep.subr.mxu0 0.0
    %1475 = vmatpush2.msra.mxu0 0.0
    %1476 = vmatprep.subr.mxu0 0.0
    %1477 = vmatpush2.msra.mxu0 0.0
    %1478 = vmatprep.subr.mxu0 0.0
    %1479 = vmatpush2.msra.mxu0 0.0
    %1480 = vmatprep.subr.mxu0 0.0
    %1481 = vmatpush2.msra.mxu0 0.0
    %1482 = vmatprep.subr.mxu0 0.0
    %1483 = vmatpush2.msra.mxu0 0.0
    %1484 = vmatprep.subr.mxu0 0.0
    %1485 = vmatpush2.msra.mxu0 0.0
    %1486 = vmatprep.subr.mxu0 0.0
    %1487 = vmatpush2.msra.mxu0 0.0
    %1488 = vmatprep.mubr.f32.mxu0 0.0
    %1489 = vmatmul.mubr.f32.gmra.mxu0 %v1141
    %v1490 = vpop.f32.mrf.mxu0
    %v1491 = vadd.f32 %v1422, %v1490
    %v1492 = vpop.f32.mrf.mxu0
    %1493 = vmatprep.mubr.f32.mxu0 0.0
    %1494 = vmatmul.mubr.f32.gmra.mxu0 %v1144
    %v1495 = vpop.f32.mrf.mxu0
    %v1496 = vadd.f32 %v1422, %v1495
    %v1497 = vpop.f32.mrf.mxu0
    %1498 = vmatprep.mubr.f32.mxu0 0.0
    %1499 = vmatmul.mubr.f32.gmra.mxu0 %v1147
    %v1500 = vpop.f32.mrf.mxu0
    %v1501 = vadd.f32 %v1422, %v1500
    %v1502 = vpop.f32.mrf.mxu0
    %1503 = vmatprep.mubr.f32.mxu0 0.0
    %1504 = vmatmul.mubr.f32.gmra.mxu0 %v1150
    %v1505 = vpop.f32.mrf.mxu0
    %v1506 = vadd.f32 %v1422, %v1505
    %v1507 = vpop.f32.mrf.mxu0
    %1508 = vmatprep.mubr.f32.mxu0 0.0
    %1509 = vmatmul.mubr.f32.gmra.mxu0 %v1153
    %v1510 = vpop.f32.mrf.mxu0
    %v1511 = vadd.f32 %v1422, %v1510
    %v1512 = vpop.f32.mrf.mxu0
    %1513 = vmatprep.mubr.f32.mxu0 0.0
    %1514 = vmatmul.mubr.f32.gmra.mxu0 %v1156
    %v1515 = vpop.f32.mrf.mxu0
    %v1516 = vadd.f32 %v1422, %v1515
    %v1517 = vpop.f32.mrf.mxu0
    %1518 = vmatprep.mubr.f32.mxu0 0.0
    %1519 = vmatmul.mubr.f32.gmra.mxu0 %v1159
    %v1520 = vpop.f32.mrf.mxu0
    %v1521 = vadd.f32 %v1422, %v1520
    %v1522 = vpop.f32.mrf.mxu0
    %1523 = vmatprep.mubr.f32.mxu0 0.0
    %1524 = vmatmul.mubr.f32.gmra.mxu0 %v1162
    %v1525 = vpop.f32.mrf.mxu0
    %v1526 = vadd.f32 %v1422, %v1525
    %v1527 = vpop.f32.mrf.mxu0
    %1528 = vmatprep.mubr.f32.mxu0 0.0
    %1529 = vmatmul.mubr.f32.gmra.mxu0 %v1165
    %v1530 = vpop.f32.mrf.mxu0
    %v1531 = vadd.f32 %v1422, %v1530
    %v1532 = vpop.f32.mrf.mxu0
    %1533 = vmatprep.mubr.f32.mxu0 0.0
    %1534 = vmatmul.mubr.f32.gmra.mxu0 %v1168
    %v1535 = vpop.f32.mrf.mxu0
    %v1536 = vadd.f32 %v1422, %v1535
    %v1537 = vpop.f32.mrf.mxu0
    %1538 = vmatprep.mubr.f32.mxu0 0.0
    %1539 = vmatmul.mubr.f32.gmra.mxu0 %v1171
    %v1540 = vpop.f32.mrf.mxu0
    %v1541 = vadd.f32 %v1422, %v1540
    %v1542 = vpop.f32.mrf.mxu0
    %1543 = vmatprep.mubr.f32.mxu0 0.0
    %1544 = vmatmul.mubr.f32.gmra.mxu0 %v1174
    %v1545 = vpop.f32.mrf.mxu0
    %v1546 = vadd.f32 %v1422, %v1545
    %v1547 = vpop.f32.mrf.mxu0
    %1548 = vmatprep.mubr.f32.mxu0 0.0
    %1549 = vmatmul.mubr.f32.gmra.mxu0 %v1177
    %v1550 = vpop.f32.mrf.mxu0
    %v1551 = vadd.f32 %v1422, %v1550
    %v1552 = vpop.f32.mrf.mxu0
    %1553 = vmatprep.mubr.f32.mxu0 0.0
    %1554 = vmatmul.mubr.f32.gmra.mxu0 %v1180
    %v1555 = vpop.f32.mrf.mxu0
    %v1556 = vadd.f32 %v1422, %v1555
    %v1557 = vpop.f32.mrf.mxu0
    %1558 = vmatprep.mubr.f32.mxu0 0.0
    %1559 = vmatmul.mubr.f32.gmra.mxu0 %v1183
    %v1560 = vpop.f32.mrf.mxu0
    %v1561 = vadd.f32 %v1422, %v1560
    %v1562 = vpop.f32.mrf.mxu0
    %1563 = vmatprep.mubr.f32.mxu0 0.0
    %1564 = vmatmul.mubr.f32.gmra.mxu0 %v1186
    %v1565 = vpop.f32.mrf.mxu0
    %v1566 = vadd.f32 %v1422, %v1565
    %v1567 = vpop.f32.mrf.mxu0
    %1568 = vdwg.mxu0
    %vm1569 = vcmask 130048
    %v1570 = vsel %vm1569, %v1491, -inf
    %1571 = vmax.xlane.f32.xlu0 %v1570
    %v1572 = vpop.xlane.xlu0 %1571
    %v1573 = vsel %vm1569, %v1496, -inf
    %1574 = vmax.xlane.f32.xlu0 %v1573
    %v1575 = vpop.xlane.xlu0 %1574
    %v1576 = vsel %vm1569, %v1501, -inf
    %1577 = vmax.xlane.f32.xlu0 %v1576
    %v1578 = vpop.xlane.xlu0 %1577
    %v1579 = vsel %vm1569, %v1506, -inf
    %1580 = vmax.xlane.f32.xlu0 %v1579
    %v1581 = vpop.xlane.xlu0 %1580
    %v1582 = vsel %vm1569, %v1511, -inf
    %1583 = vmax.xlane.f32.xlu0 %v1582
    %v1584 = vpop.xlane.xlu0 %1583
    %v1585 = vsel %vm1569, %v1516, -inf
    %1586 = vmax.xlane.f32.xlu0 %v1585
    %v1587 = vpop.xlane.xlu0 %1586
    %v1588 = vsel %vm1569, %v1521, -inf
    %1589 = vmax.xlane.f32.xlu0 %v1588
    %v1590 = vpop.xlane.xlu0 %1589
    %v1591 = vsel %vm1569, %v1526, -inf
    %1592 = vmax.xlane.f32.xlu0 %v1591
    %v1593 = vpop.xlane.xlu0 %1592
    %v1594 = vsel %vm1569, %v1531, -inf
    %1595 = vmax.xlane.f32.xlu0 %v1594
    %v1596 = vpop.xlane.xlu0 %1595
    %v1597 = vsel %vm1569, %v1536, -inf
    %1598 = vmax.xlane.f32.xlu0 %v1597
    %v1599 = vpop.xlane.xlu0 %1598
    %v1600 = vsel %vm1569, %v1541, -inf
    %1601 = vmax.xlane.f32.xlu0 %v1600
    %v1602 = vpop.xlane.xlu0 %1601
    %v1603 = vsel %vm1569, %v1546, -inf
    %1604 = vmax.xlane.f32.xlu0 %v1603
    %v1605 = vpop.xlane.xlu0 %1604
    %v1606 = vsel %vm1569, %v1551, -inf
    %1607 = vmax.xlane.f32.xlu0 %v1606
    %v1608 = vpop.xlane.xlu0 %1607
    %v1609 = vsel %vm1569, %v1556, -inf
    %1610 = vmax.xlane.f32.xlu0 %v1609
    %v1611 = vpop.xlane.xlu0 %1610
    %v1612 = vsel %vm1569, %v1561, -inf
    %1613 = vmax.xlane.f32.xlu0 %v1612
    %v1614 = vpop.xlane.xlu0 %1613
    %v1615 = vsel %vm1569, %v1566, -inf
    %1616 = vmax.xlane.f32.xlu0 %v1615
    %v1617 = vpop.xlane.xlu0 %1616
    %v1618 = vsub.f32 %v1491, %v1572
    %v1619 = vsub.f32 %v1496, %v1575
    %v1620 = vsub.f32 %v1501, %v1578
    %v1621 = vsub.f32 %v1506, %v1581
    %v1622 = vsub.f32 %v1511, %v1584
    %v1623 = vsub.f32 %v1516, %v1587
    %v1624 = vsub.f32 %v1521, %v1590
    %v1625 = vsub.f32 %v1526, %v1593
    %v1626 = vsub.f32 %v1531, %v1596
    %v1627 = vsub.f32 %v1536, %v1599
    %v1628 = vsub.f32 %v1541, %v1602
    %v1629 = vsub.f32 %v1546, %v1605
    %v1630 = vsub.f32 %v1551, %v1608
    %v1631 = vsub.f32 %v1556, %v1611
    %v1632 = vsub.f32 %v1561, %v1614
    %v1633 = vsub.f32 %v1566, %v1617
    %v1634 = vmul.f32 %v1618, 1.442695
    %v1635 = vpow.pop %v1634
    %v1636 = vmul.f32 %v1619, 1.442695
    %v1637 = vpow.pop %v1636
    %v1638 = vmul.f32 %v1620, 1.442695
    %v1639 = vpow.pop %v1638
    %v1640 = vmul.f32 %v1621, 1.442695
    %v1641 = vpow.pop %v1640
    %v1642 = vmul.f32 %v1622, 1.442695
    %v1643 = vpow.pop %v1642
    %v1644 = vmul.f32 %v1623, 1.442695
    %v1645 = vpow.pop %v1644
    %v1646 = vmul.f32 %v1624, 1.442695
    %v1647 = vpow.pop %v1646
    %v1648 = vmul.f32 %v1625, 1.442695
    %v1649 = vpow.pop %v1648
    %v1650 = vmul.f32 %v1626, 1.442695
    %v1651 = vpow.pop %v1650
    %v1652 = vmul.f32 %v1627, 1.442695
    %v1653 = vpow.pop %v1652
    %v1654 = vmul.f32 %v1628, 1.442695
    %v1655 = vpow.pop %v1654
    %v1656 = vmul.f32 %v1629, 1.442695
    %v1657 = vpow.pop %v1656
    %v1658 = vmul.f32 %v1630, 1.442695
    %v1659 = vpow.pop %v1658
    %v1660 = vmul.f32 %v1631, 1.442695
    %v1661 = vpow.pop %v1660
    %v1662 = vmul.f32 %v1632, 1.442695
    %v1663 = vpow.pop %v1662
    %v1664 = vmul.f32 %v1633, 1.442695
    %v1665 = vpow.pop %v1664
    %v1666 = vsel %vm1569, %v1635, 0.0
    %1667 = vadd.xlane.f32.xlu0 %v1666
    %v1668 = vpop.xlane.xlu0 %1667
    %v1669 = vsel %vm1569, %v1637, 0.0
    %1670 = vadd.xlane.f32.xlu0 %v1669
    %v1671 = vpop.xlane.xlu0 %1670
    %v1672 = vsel %vm1569, %v1639, 0.0
    %1673 = vadd.xlane.f32.xlu0 %v1672
    %v1674 = vpop.xlane.xlu0 %1673
    %v1675 = vsel %vm1569, %v1641, 0.0
    %1676 = vadd.xlane.f32.xlu0 %v1675
    %v1677 = vpop.xlane.xlu0 %1676
    %v1678 = vsel %vm1569, %v1643, 0.0
    %1679 = vadd.xlane.f32.xlu0 %v1678
    %v1680 = vpop.xlane.xlu0 %1679
    %v1681 = vsel %vm1569, %v1645, 0.0
    %1682 = vadd.xlane.f32.xlu0 %v1681
    %v1683 = vpop.xlane.xlu0 %1682
    %v1684 = vsel %vm1569, %v1647, 0.0
    %1685 = vadd.xlane.f32.xlu0 %v1684
    %v1686 = vpop.xlane.xlu0 %1685
    %v1687 = vsel %vm1569, %v1649, 0.0
    %1688 = vadd.xlane.f32.xlu0 %v1687
    %v1689 = vpop.xlane.xlu0 %1688
    %v1690 = vsel %vm1569, %v1651, 0.0
    %1691 = vadd.xlane.f32.xlu0 %v1690
    %v1692 = vpop.xlane.xlu0 %1691
    %v1693 = vsel %vm1569, %v1653, 0.0
    %1694 = vadd.xlane.f32.xlu0 %v1693
    %v1695 = vpop.xlane.xlu0 %1694
    %v1696 = vsel %vm1569, %v1655, 0.0
    %1697 = vadd.xlane.f32.xlu0 %v1696
    %v1698 = vpop.xlane.xlu0 %1697
    %v1699 = vsel %vm1569, %v1657, 0.0
    %1700 = vadd.xlane.f32.xlu0 %v1699
    %v1701 = vpop.xlane.xlu0 %1700
    %v1702 = vsel %vm1569, %v1659, 0.0
    %1703 = vadd.xlane.f32.xlu0 %v1702
    %v1704 = vpop.xlane.xlu0 %1703
    %v1705 = vsel %vm1569, %v1661, 0.0
    %1706 = vadd.xlane.f32.xlu0 %v1705
    %v1707 = vpop.xlane.xlu0 %1706
    %v1708 = vsel %vm1569, %v1663, 0.0
    %1709 = vadd.xlane.f32.xlu0 %v1708
    %v1710 = vpop.xlane.xlu0 %1709
    %v1711 = vsel %vm1569, %v1665, 0.0
    %1712 = vadd.xlane.f32.xlu0 %v1711
    %v1713 = vpop.xlane.xlu0 %1712
    %v1714 = vrcp.pop %v1668
    %v1715 = vrcp.pop %v1671
    %v1716 = vrcp.pop %v1674
    %v1717 = vrcp.pop %v1677
    %v1718 = vrcp.pop %v1680
    %v1719 = vrcp.pop %v1683
    %v1720 = vrcp.pop %v1686
    %v1721 = vrcp.pop %v1689
    %v1722 = vrcp.pop %v1692
    %v1723 = vrcp.pop %v1695
    %v1724 = vrcp.pop %v1698
    %v1725 = vrcp.pop %v1701
    %v1726 = vrcp.pop %v1704
    %v1727 = vrcp.pop %v1707
    %v1728 = vrcp.pop %v1710
    %v1729 = vrcp.pop %v1713
    %v1730 = vmul.f32 %v1635, %v1714
    %v1731 = vmul.f32 %v1637, %v1715
    %v1732 = vmul.f32 %v1639, %v1716
    %v1733 = vmul.f32 %v1641, %v1717
    %v1734 = vmul.f32 %v1643, %v1718
    %v1735 = vmul.f32 %v1645, %v1719
    %v1736 = vmul.f32 %v1647, %v1720
    %v1737 = vmul.f32 %v1649, %v1721
    %v1738 = vmul.f32 %v1651, %v1722
    %v1739 = vmul.f32 %v1653, %v1723
    %v1740 = vmul.f32 %v1655, %v1724
    %v1741 = vmul.f32 %v1657, %v1725
    %v1742 = vmul.f32 %v1659, %v1726
    %v1743 = vmul.f32 %v1661, %v1727
    %v1744 = vmul.f32 %v1663, %v1728
    %v1745 = vmul.f32 %v1665, %v1729
    %v1746 = vmul.f32 %v1730, 0.9
    %v1747 = vmul.f32 %v1731, 0.9
    %v1748 = vmul.f32 %v1732, 0.9
    %v1749 = vmul.f32 %v1733, 0.9
    %v1750 = vmul.f32 %v1734, 0.9
    %v1751 = vmul.f32 %v1735, 0.9
    %v1752 = vmul.f32 %v1736, 0.9
    %v1753 = vmul.f32 %v1737, 0.9
    %v1754 = vmul.f32 %v1738, 0.9
    %v1755 = vmul.f32 %v1739, 0.9
    %v1756 = vmul.f32 %v1740, 0.9
    %v1757 = vmul.f32 %v1741, 0.9
    %v1758 = vmul.f32 %v1742, 0.9
    %v1759 = vmul.f32 %v1743, 0.9
    %v1760 = vmul.f32 %v1744, 0.9
    %v1761 = vmul.f32 %v1745, 0.9
    %v1762 = vsel %vm1569, %v1746, 0.0
    %1763 = vadd.xlane.f32.xlu0 %v1762
    %v1764 = vpop.xlane.xlu0 %1763
    %v1765 = vsel %vm1569, %v1747, 0.0
    %1766 = vadd.xlane.f32.xlu0 %v1765
    %v1767 = vpop.xlane.xlu0 %1766
    %v1768 = vsel %vm1569, %v1748, 0.0
    %1769 = vadd.xlane.f32.xlu0 %v1768
    %v1770 = vpop.xlane.xlu0 %1769
    %v1771 = vsel %vm1569, %v1749, 0.0
    %1772 = vadd.xlane.f32.xlu0 %v1771
    %v1773 = vpop.xlane.xlu0 %1772
    %v1774 = vsel %vm1569, %v1750, 0.0
    %1775 = vadd.xlane.f32.xlu0 %v1774
    %v1776 = vpop.xlane.xlu0 %1775
    %v1777 = vsel %vm1569, %v1751, 0.0
    %1778 = vadd.xlane.f32.xlu0 %v1777
    %v1779 = vpop.xlane.xlu0 %1778
    %v1780 = vsel %vm1569, %v1752, 0.0
    %1781 = vadd.xlane.f32.xlu0 %v1780
    %v1782 = vpop.xlane.xlu0 %1781
    %v1783 = vsel %vm1569, %v1753, 0.0
    %1784 = vadd.xlane.f32.xlu0 %v1783
    %v1785 = vpop.xlane.xlu0 %1784
    %v1786 = vsel %vm1569, %v1754, 0.0
    %1787 = vadd.xlane.f32.xlu0 %v1786
    %v1788 = vpop.xlane.xlu0 %1787
    %v1789 = vsel %vm1569, %v1755, 0.0
    %1790 = vadd.xlane.f32.xlu0 %v1789
    %v1791 = vpop.xlane.xlu0 %1790
    %v1792 = vsel %vm1569, %v1756, 0.0
    %1793 = vadd.xlane.f32.xlu0 %v1792
    %v1794 = vpop.xlane.xlu0 %1793
    %v1795 = vsel %vm1569, %v1757, 0.0
    %1796 = vadd.xlane.f32.xlu0 %v1795
    %v1797 = vpop.xlane.xlu0 %1796
    %v1798 = vsel %vm1569, %v1758, 0.0
    %1799 = vadd.xlane.f32.xlu0 %v1798
    %v1800 = vpop.xlane.xlu0 %1799
    %v1801 = vsel %vm1569, %v1759, 0.0
    %1802 = vadd.xlane.f32.xlu0 %v1801
    %v1803 = vpop.xlane.xlu0 %1802
    %v1804 = vsel %vm1569, %v1760, 0.0
    %1805 = vadd.xlane.f32.xlu0 %v1804
    %v1806 = vpop.xlane.xlu0 %1805
    %v1807 = vsel %vm1569, %v1761, 0.0
    %1808 = vadd.xlane.f32.xlu0 %v1807
    %v1809 = vpop.xlane.xlu0 %1808
    %1826 = vrot.lane.b32.xlu0 %v896, 4
    %v1827 = vpop.permute.xlu0 %1826
    %1828 = vrot.lane.b32.xlu0 %v897, 4
    %v1829 = vpop.permute.xlu0 %1828
    %1830 = vrot.lane.b32.xlu0 %v898, 4
    %v1831 = vpop.permute.xlu0 %1830
    %1832 = vrot.lane.b32.xlu0 %v899, 4
    %v1833 = vpop.permute.xlu0 %1832
    %1834 = vrot.lane.b32.xlu0 %v900, 4
    %v1835 = vpop.permute.xlu0 %1834
    %1836 = vrot.lane.b32.xlu0 %v901, 4
    %v1837 = vpop.permute.xlu0 %1836
    %1838 = vrot.lane.b32.xlu0 %v902, 4
    %v1839 = vpop.permute.xlu0 %1838
    %1840 = vrot.lane.b32.xlu0 %v903, 4
    %v1841 = vpop.permute.xlu0 %1840
    %1842 = vrot.lane.b32.xlu0 %v904, 4
    %v1843 = vpop.permute.xlu0 %1842
    %1844 = vrot.lane.b32.xlu0 %v905, 4
    %v1845 = vpop.permute.xlu0 %1844
    %1846 = vrot.lane.b32.xlu0 %v906, 4
    %v1847 = vpop.permute.xlu0 %1846
    %1848 = vrot.lane.b32.xlu0 %v907, 4
    %v1849 = vpop.permute.xlu0 %1848
    %1850 = vrot.lane.b32.xlu0 %v908, 4
    %v1851 = vpop.permute.xlu0 %1850
    %1852 = vrot.lane.b32.xlu0 %v909, 4
    %v1853 = vpop.permute.xlu0 %1852
    %1854 = vrot.lane.b32.xlu0 %v910, 4
    %v1855 = vpop.permute.xlu0 %1854
    %1856 = vrot.lane.b32.xlu0 %v911, 4
    %v1857 = vpop.permute.xlu0 %1856
    %1890 = vrot.lane.b32.xlu0 %v1397, 36
    %v1891 = vpop.permute.xlu0 %1890
    %1892 = vrot.lane.b32.xlu0 %v1398, 36
    %v1893 = vpop.permute.xlu0 %1892
    %1894 = vrot.lane.b32.xlu0 %v1399, 36
    %v1895 = vpop.permute.xlu0 %1894
    %1896 = vrot.lane.b32.xlu0 %v1400, 36
    %v1897 = vpop.permute.xlu0 %1896
    %1898 = vrot.lane.b32.xlu0 %v1401, 36
    %v1899 = vpop.permute.xlu0 %1898
    %1900 = vrot.lane.b32.xlu0 %v1402, 36
    %v1901 = vpop.permute.xlu0 %1900
    %1902 = vrot.lane.b32.xlu0 %v1403, 36
    %v1903 = vpop.permute.xlu0 %1902
    %1904 = vrot.lane.b32.xlu0 %v1404, 36
    %v1905 = vpop.permute.xlu0 %1904
    %1906 = vrot.lane.b32.xlu0 %v1405, 36
    %v1907 = vpop.permute.xlu0 %1906
    %1908 = vrot.lane.b32.xlu0 %v1406, 36
    %v1909 = vpop.permute.xlu0 %1908
    %1910 = vrot.lane.b32.xlu0 %v1407, 36
    %v1911 = vpop.permute.xlu0 %1910
    %1912 = vrot.lane.b32.xlu0 %v1408, 36
    %v1913 = vpop.permute.xlu0 %1912
    %1914 = vrot.lane.b32.xlu0 %v1409, 36
    %v1915 = vpop.permute.xlu0 %1914
    %1916 = vrot.lane.b32.xlu0 %v1410, 36
    %v1917 = vpop.permute.xlu0 %1916
    %1918 = vrot.lane.b32.xlu0 %v1411, 36
    %v1919 = vpop.permute.xlu0 %1918
    %1920 = vrot.lane.b32.xlu0 %v1412, 36
    %v1921 = vpop.permute.xlu0 %1920
    %1954 = vrot.lane.b32.xlu0 %v1746, 40
    %v1955 = vpop.permute.xlu0 %1954
    %1956 = vrot.lane.b32.xlu0 %v1747, 40
    %v1957 = vpop.permute.xlu0 %1956
    %1958 = vrot.lane.b32.xlu0 %v1748, 40
    %v1959 = vpop.permute.xlu0 %1958
    %1960 = vrot.lane.b32.xlu0 %v1749, 40
    %v1961 = vpop.permute.xlu0 %1960
    %1962 = vrot.lane.b32.xlu0 %v1750, 40
    %v1963 = vpop.permute.xlu0 %1962
    %1964 = vrot.lane.b32.xlu0 %v1751, 40
    %v1965 = vpop.permute.xlu0 %1964
    %1966 = vrot.lane.b32.xlu0 %v1752, 40
    %v1967 = vpop.permute.xlu0 %1966
    %1968 = vrot.lane.b32.xlu0 %v1753, 40
    %v1969 = vpop.permute.xlu0 %1968
    %1970 = vrot.lane.b32.xlu0 %v1754, 40
    %v1971 = vpop.permute.xlu0 %1970
    %1972 = vrot.lane.b32.xlu0 %v1755, 40
    %v1973 = vpop.permute.xlu0 %1972
    %1974 = vrot.lane.b32.xlu0 %v1756, 40
    %v1975 = vpop.permute.xlu0 %1974
    %1976 = vrot.lane.b32.xlu0 %v1757, 40
    %v1977 = vpop.permute.xlu0 %1976
    %1978 = vrot.lane.b32.xlu0 %v1758, 40
    %v1979 = vpop.permute.xlu0 %1978
    %1980 = vrot.lane.b32.xlu0 %v1759, 40
    %v1981 = vpop.permute.xlu0 %1980
    %1982 = vrot.lane.b32.xlu0 %v1760, 40
    %v1983 = vpop.permute.xlu0 %1982
    %1984 = vrot.lane.b32.xlu0 %v1761, 40
    %v1985 = vpop.permute.xlu0 %1984
    %vm2002 = vcmask 23552
    %v2003 = vsel %vm2002, %v548, %v914
    %v2004 = vsel %vm2002, %v549, %v917
    %v2005 = vsel %vm2002, %v550, %v920
    %v2006 = vsel %vm2002, %v551, %v923
    %v2007 = vsel %vm2002, %v552, %v926
    %v2008 = vsel %vm2002, %v553, %v929
    %v2009 = vsel %vm2002, %v554, %v932
    %v2010 = vsel %vm2002, %v555, %v935
    %v2011 = vsel %vm2002, %v556, %v938
    %v2012 = vsel %vm2002, %v557, %v941
    %v2013 = vsel %vm2002, %v558, %v944
    %v2014 = vsel %vm2002, %v559, %v947
    %v2015 = vsel %vm2002, %v560, %v950
    %v2016 = vsel %vm2002, %v561, %v953
    %v2017 = vsel %vm2002, %v562, %v956
    %v2018 = vsel %vm2002, %v563, %v959
    %vm2019 = vcmask 31744
    %v2020 = vsel %vm2019, %v2003, %v1827
    %v2021 = vsel %vm2019, %v2004, %v1829
    %v2022 = vsel %vm2019, %v2005, %v1831
    %v2023 = vsel %vm2019, %v2006, %v1833
    %v2024 = vsel %vm2019, %v2007, %v1835
    %v2025 = vsel %vm2019, %v2008, %v1837
    %v2026 = vsel %vm2019, %v2009, %v1839
    %v2027 = vsel %vm2019, %v2010, %v1841
    %v2028 = vsel %vm2019, %v2011, %v1843
    %v2029 = vsel %vm2019, %v2012, %v1845
    %v2030 = vsel %vm2019, %v2013, %v1847
    %v2031 = vsel %vm2019, %v2014, %v1849
    %v2032 = vsel %vm2019, %v2015, %v1851
    %v2033 = vsel %vm2019, %v2016, %v1853
    %v2034 = vsel %vm2019, %v2017, %v1855
    %v2035 = vsel %vm2019, %v2018, %v1857
    %vm2036 = vcmask 293888
    %v2037 = vsel %vm2036, %v2020, %v1891
    %v2038 = vsel %vm2036, %v2021, %v1893
    %v2039 = vsel %vm2036, %v2022, %v1895
    %v2040 = vsel %vm2036, %v2023, %v1897
    %v2041 = vsel %vm2036, %v2024, %v1899
    %v2042 = vsel %vm2036, %v2025, %v1901
    %v2043 = vsel %vm2036, %v2026, %v1903
    %v2044 = vsel %vm2036, %v2027, %v1905
    %v2045 = vsel %vm2036, %v2028, %v1907
    %v2046 = vsel %vm2036, %v2029, %v1909
    %v2047 = vsel %vm2036, %v2030, %v1911
    %v2048 = vsel %vm2036, %v2031, %v1913
    %v2049 = vsel %vm2036, %v2032, %v1915
    %v2050 = vsel %vm2036, %v2033, %v1917
    %v2051 = vsel %vm2036, %v2034, %v1919
    %v2052 = vsel %vm2036, %v2035, %v1921
    %vm2053 = vcmask 318464
    %v2054 = vsel %vm2053, %v2037, %v1764
    %v2055 = vsel %vm2053, %v2038, %v1767
    %v2056 = vsel %vm2053, %v2039, %v1770
    %v2057 = vsel %vm2053, %v2040, %v1773
    %v2058 = vsel %vm2053, %v2041, %v1776
    %v2059 = vsel %vm2053, %v2042, %v1779
    %v2060 = vsel %vm2053, %v2043, %v1782
    %v2061 = vsel %vm2053, %v2044, %v1785
    %v2062 = vsel %vm2053, %v2045, %v1788
    %v2063 = vsel %vm2053, %v2046, %v1791
    %v2064 = vsel %vm2053, %v2047, %v1794
    %v2065 = vsel %vm2053, %v2048, %v1797
    %v2066 = vsel %vm2053, %v2049, %v1800
    %v2067 = vsel %vm2053, %v2050, %v1803
    %v2068 = vsel %vm2053, %v2051, %v1806
    %v2069 = vsel %vm2053, %v2052, %v1809
    %vm2070 = vcmask 326656
    %v2071 = vsel %vm2070, %v2054, %v1955
    %v2072 = vsel %vm2070, %v2055, %v1957
    %v2073 = vsel %vm2070, %v2056, %v1959
    %v2074 = vsel %vm2070, %v2057, %v1961
    %v2075 = vsel %vm2070, %v2058, %v1963
    %v2076 = vsel %vm2070, %v2059, %v1965
    %v2077 = vsel %vm2070, %v2060, %v1967
    %v2078 = vsel %vm2070, %v2061, %v1969
    %v2079 = vsel %vm2070, %v2062, %v1971
    %v2080 = vsel %vm2070, %v2063, %v1973
    %v2081 = vsel %vm2070, %v2064, %v1975
    %v2082 = vsel %vm2070, %v2065, %v1977
    %v2083 = vsel %vm2070, %v2066, %v1979
    %v2084 = vsel %vm2070, %v2067, %v1981
    %v2085 = vsel %vm2070, %v2068, %v1983
    %v2086 = vsel %vm2070, %v2069, %v1985
    %vm2087 = vcmask 457728
    %v2088 = vsel %vm2087, %v2071, 0.0
    %v2089 = vsel %vm2087, %v2072, 0.0
    %v2090 = vsel %vm2087, %v2073, 0.0
    %v2091 = vsel %vm2087, %v2074, 0.0
    %v2092 = vsel %vm2087, %v2075, 0.0
    %v2093 = vsel %vm2087, %v2076, 0.0
    %v2094 = vsel %vm2087, %v2077, 0.0
    %v2095 = vsel %vm2087, %v2078, 0.0
    %v2096 = vsel %vm2087, %v2079, 0.0
    %v2097 = vsel %vm2087, %v2080, 0.0
    %v2098 = vsel %vm2087, %v2081, 0.0
    %v2099 = vsel %vm2087, %v2082, 0.0
    %v2100 = vsel %vm2087, %v2083, 0.0
    %v2101 = vsel %vm2087, %v2084, 0.0
    %v2102 = vsel %vm2087, %v2085, 0.0
    %v2103 = vsel %vm2087, %v2086, 0.0
    %2104 = vst [vmem:[#allocation2] sm:$0xff] %v2088
    %2105 = vst [vmem:[#allocation2 + $0x8] sm:$0xff] %v2089
    %2106 = vst [vmem:[#allocation2 + $0x10] sm:$0xff] %v2090
    %2107 = vst [vmem:[#allocation2 + $0x18] sm:$0xff] %v2091
    %2108 = vst [vmem:[#allocation2 + $0x20] sm:$0xff] %v2092
    %2109 = vst [vmem:[#allocation2 + $0x28] sm:$0xff] %v2093
    %2110 = vst [vmem:[#allocation2 + $0x30] sm:$0xff] %v2094
    %2111 = vst [vmem:[#allocation2 + $0x38] sm:$0xff] %v2095
    %2112 = vst [vmem:[#allocation2 + $0x40] sm:$0xff] %v2096
    %2113 = vst [vmem:[#allocation2 + $0x48] sm:$0xff] %v2097
    %2114 = vst [vmem:[#allocation2 + $0x50] sm:$0xff] %v2098
    %2115 = vst [vmem:[#allocation2 + $0x58] sm:$0xff] %v2099
    %2116 = vst [vmem:[#allocation2 + $0x60] sm:$0xff] %v2100
    %2117 = vst [vmem:[#allocation2 + $0x68] sm:$0xff] %v2101
    %2118 = vst [vmem:[#allocation2 + $0x70] sm:$0xff] %v2102
    %2119 = vst [vmem:[#allocation2 + $0x78] sm:$0xff] %v2103
    // Predicated region
    $region54: #{tpu_custom_call.1} parent=1 // pred_check
      _
    $region55: #{tpu_custom_call.1} parent=1 // pred_check_branch
      %2121 = sbr.rel (0) target = $region57
    $region56: #{tpu_custom_call.1} parent=1 // pred_region
      %s2123 = ssub.s32 2048, 2048
      %2124 = vsyncadd [#allocation3], %s2123
      %s2125 = sshll.u32 [#allocation2], 4
      %s2126 = int_to_ptr.vmem [resolvable:$true] %s2125
      %2131 = dma.vmem_to_hbm [thread:$0]  %s2126, 2048, %s13, [#allocation3], 128, 128, 8
    $region57: #{tpu_custom_call.1} parent=1 // pred_fallthru
      _
    // Predicated region
    $region58: #{tpu_custom_call.1} parent=1 // pred_check
      _
    $region59: #{tpu_custom_call.1} parent=1 // pred_check_branch
      %2133 = sbr.rel (0) target = $region61
    $region60: #{tpu_custom_call.1} parent=1 // pred_region
      %2134 = dma.done [#allocation3], 2048
    $region61: #{tpu_custom_call.1} parent=1 // pred_fallthru
      _
    %2135 = vsyncpa [#allocation3], 1

</llo_original>
